<compile_context>
chip_gen: v6e
topology: v6e:2x2x1
jax: 0.10.0
libtpu: 0.0.40
codegen_flags: <defaults>
</compile_context>

<pallas_src>
import functools
from types import SimpleNamespace

import jax
import jax.numpy as jnp
from jax.experimental import pallas as pl
from jax.experimental.pallas import tpu as pltpu


def _round_up(x, m):
    return (x + m - 1) // m * m


# ----------------------------------------------------------------------------
# Pallas kernel (feature-major: features on sublanes, points on lanes).
# ----------------------------------------------------------------------------
def _nerf_kernel(n_layers, hidden, kx, data_ref, wes_ref, wec_ref, wer_ref,
                 wh_ref, b_ref, wv_ref, wr_ref, out_ref):
    skip = n_layers // 2 + 1
    hh = hidden // 2
    vh = _round_up(hh + 1, 8)
    f32, bf16 = jnp.float32, jnp.bfloat16

    slab = data_ref[...]                     # (kx + vh, tp) f32
    ph = slab[0:kx, :]                       # xyz phases, freq-major (pad rows = 0)
    vadd = slab[kx:kx + vh, :]               # per-ray view-head contribution (+bias)

    # Dense trig over the whole phase block — the kernel's main VALU work.
    s = jnp.sin(ph).astype(bf16)             # (kx, tp)
    c = jnp.cos(ph).astype(bf16)             # (kx, tp)   (cos(0)=1 on pad rows * 0-weights)
    raw = ph[0:8, :].astype(bf16)            # rows 0..2 = raw pts (freq 2^0); rest x 0-weights

    def emb_dot(j):
        return (jnp.dot(wes_ref[j], s, preferred_element_type=f32)
                + jnp.dot(wec_ref[j], c, preferred_element_type=f32)
                + jnp.dot(wer_ref[j], raw, preferred_element_type=f32))

    # --- xyz MLP trunk (skip layer uses split matmuls, no lane concat) ---
    x = None
    h_idx = 0
    for i in range(n_layers):
        b = b_ref[:, i:i + 1]                # (hidden, 1) f32
        if i == 0:
            acc = emb_dot(0) + b
        elif i == skip:
            acc = (jnp.dot(wh_ref[h_idx], x, preferred_element_type=f32)
                   + emb_dot(1) + b)
            h_idx += 1
        else:
            acc = jnp.dot(wh_ref[h_idx], x, preferred_element_type=f32) + b
            h_idx += 1
        if i != n_layers - 1:
            acc = jnp.maximum(acc, 0.0)      # ReLU
        x = acc.astype(bf16)                 # (hidden, tp)

    # --- fused view head: rows 0..hh-1 -> rgb hidden, row hh -> sigma ---
    head = jnp.dot(wv_ref[...], x, preferred_element_type=f32) + vadd   # (vh, tp)
    density = jnp.maximum(head[hh:hh + 1, :], 0.0)                      # (1, tp)
    hid = head[0:hh, :].astype(bf16)                                    # (hh, tp)

    br = b_ref[0:8, n_layers:n_layers + 1]                              # (8, 1)
    rgb_lin = jnp.dot(wr_ref[...], hid, preferred_element_type=f32) + br
    # sigmoid via tanh -> EUP slot instead of a VPU divide
    rgb = 0.5 * (jnp.tanh(0.5 * rgb_lin[0:3, :]) + 1.0)                 # (3, tp)

    out_ref[0:3, :] = rgb
    out_ref[3:4, :] = density


# ----------------------------------------------------------------------------
# Parameter init (PyTorch nn.Linear layout / default init).
# ----------------------------------------------------------------------------
def init_params(cfg, key):
    D_xyz = 6 * cfg.n_harmonic_functions_xyz + 3
    D_dir = 6 * cfg.n_harmonic_functions_dir + 3
    H = cfg.n_hidden_neurons_xyz

    def linear(key, fan_in, fan_out):
        kw, kb = jax.random.split(key)
        lim = 1.0 / jnp.sqrt(jnp.float32(fan_in))
        W = jax.random.uniform(kw, (fan_in, fan_out), jnp.float32, -lim, lim)
        b = jax.random.uniform(kb, (1, fan_out), jnp.float32, -lim, lim)
        return W, b

    params = []
    skip_idx = cfg.n_layers_xyz // 2 + 1
    keys = jax.random.split(key, cfg.n_layers_xyz + 3)
    for i in range(cfg.n_layers_xyz):
        if i == 0:
            fan_in = D_xyz
        elif i == skip_idx:
            fan_in = H + D_xyz               # concat([x, embed_points])
        else:
            fan_in = H
        params.extend(linear(keys[i], fan_in, H))

    params.extend(linear(keys[cfg.n_layers_xyz], H + D_dir, 1))        # sigma_view
    params.extend(linear(keys[cfg.n_layers_xyz + 1], H + D_dir, H // 2))  # rgb_view[0]
    params.extend(linear(keys[cfg.n_layers_xyz + 2], H // 2, 3))          # rgb_view[1]
    return params


# ----------------------------------------------------------------------------
# Kernel-layout weight prep (done once, wrapper side).
# ----------------------------------------------------------------------------
def _prepare_weights(cfg, params):
    H = cfg.n_hidden_neurons_xyz
    L = cfg.n_layers_xyz
    assert L >= 3, "n_layers_xyz must be >= 3 (skip layer inside the trunk)"
    skip = L // 2 + 1
    hh = H // 2
    n_hx = cfg.n_harmonic_functions_xyz
    Kx = _round_up(3 * n_hx, 8)
    VH = _round_up(hh + 1, 8)
    bf16 = jnp.bfloat16

    def emb_split(W_emb):
        # W_emb: (6*n_hx+3, H), original row order [sin (chan-major) | cos | raw].
        n = 3 * n_hx
        perm = jnp.array([c * n_hx + k for k in range(n_hx) for c in range(3)],
                         dtype=jnp.int32)        # -> freq-major rows k*3+c
        Ws = jnp.pad(W_emb[:n][perm], ((0, Kx - n), (0, 0)))
        Wc = jnp.pad(W_emb[n:2 * n][perm], ((0, Kx - n), (0, 0)))
        Wr = jnp.pad(W_emb[2 * n:2 * n + 3], ((0, 5), (0, 0)))   # raw -> 8 rows
        return Ws.T, Wc.T, Wr.T                  # feature-major (H, K)

    w_sin, w_cos, w_raw, w_hid, biases = [], [], [], [], []
    idx = 0
    for i in range(L):
        W, b = params[idx], params[idx + 1]
        idx += 2
        biases.append(b[0])
        if i == 0:
            s_, c_, r_ = emb_split(W)
            w_sin.append(s_); w_cos.append(c_); w_raw.append(r_)
        elif i == skip:
            w_hid.append(W[:H].T)
            s_, c_, r_ = emb_split(W[H:])
            w_sin.append(s_); w_cos.append(c_); w_raw.append(r_)
        else:
            w_hid.append(W.T)

    W_s, b_s = params[idx], params[idx + 1]
    W_r0, b_r0 = params[idx + 2], params[idx + 3]
    W_r1, b_r1 = params[idx + 4], params[idx + 5]

    # Fused view head: columns 0..hh-1 = rgb hidden, column hh = sigma.
    W_head = jnp.concatenate([W_r0, W_s], axis=1)            # (H + D_dir, hh+1)
    b_head = jnp.concatenate([b_r0, b_s], axis=1)            # (1, hh+1)
    w_view = jnp.pad(W_head[:H].T, ((0, VH - (hh + 1)), (0, 0)))   # (VH, H)
    w_rgb = jnp.pad(W_r1.T, ((0, 8 - 3), (0, 0)))                  # (8, hh)

    # Biases packed as columns: (H, L+1); column L rows 0..2 = final rgb bias.
    b_all = jnp.stack(biases, axis=1)                         # (H, L)
    b_rgb_col = jnp.pad(b_r1[0], (0, H - 3))[:, None]         # (H, 1)
    b_all = jnp.concatenate([b_all, b_rgb_col], axis=1)       # (H, L+1)

    weights = dict(
        w_emb_sin=jnp.stack(w_sin).astype(bf16),    # (2, H, Kx)
        w_emb_cos=jnp.stack(w_cos).astype(bf16),    # (2, H, Kx)
        w_emb_raw=jnp.stack(w_raw).astype(bf16),    # (2, H, 8)
        w_hid=jnp.stack(w_hid).astype(bf16),        # (L-1, H, H)
        b_all=b_all.astype(jnp.float32),            # (H, L+1)
        w_view=w_view.astype(bf16),                 # (VH, H)
        w_rgb=w_rgb.astype(bf16),                   # (8, hh)
    )
    # Direction part of the view head, applied per-ray in the wrapper (dedup).
    return weights, W_head[H:], b_head


# ----------------------------------------------------------------------------
# Wrapper
# ----------------------------------------------------------------------------
def neural_radiance_field(cfg, params, sample_points, directions, tile_p=4096):
    n_rays, n_samples, _ = sample_points.shape
    P = n_rays * n_samples
    H = cfg.n_hidden_neurons_xyz
    L = cfg.n_layers_xyz
    hh = H // 2
    n_hx = cfg.n_harmonic_functions_xyz
    n_hd = cfg.n_harmonic_functions_dir
    Kx = _round_up(3 * n_hx, 8)
    VH = _round_up(hh + 1, 8)

    # Point tile: large for amortization; shrink for small inputs so we don't
    # over-pad and so large inputs still give >=2 grid steps (v7x megacore).
    tp = _round_up(max(tile_p, 128), 128)
    while tp > 256 and _round_up(P, tp) // tp < 2:
        tp = _round_up(tp // 2, 128)
    tp = max(128, min(tp, _round_up(P, 128)))
    P_pad = _round_up(P, tp)

    weights, W_view_dir, b_head = _prepare_weights(cfg, params)

    # --- lane-dense f32 data slab: rows [xyz phases | 0-pad | view-add | 0-pad]
    pts = sample_points.reshape(P, 3).astype(jnp.float32)
    freqs = 2.0 ** jnp.arange(n_hx, dtype=jnp.float32)
    ph = (pts[:, None, :] * freqs[None, :, None]).reshape(P, 3 * n_hx)   # freq-major
    ph = jnp.pad(ph, ((0, 0), (0, Kx - 3 * n_hx)))                        # (P, Kx)

    # Per-ray direction embedding folded through the view head (dedup across samples).
    ed = harmonic_embedding(directions.astype(jnp.float32), n_hd)         # (n_rays, D_dir)
    vadd_ray = ed @ W_view_dir + b_head                                   # (n_rays, hh+1)
    vadd = jnp.broadcast_to(vadd_ray[:, None, :],
                            (n_rays, n_samples, hh + 1)).reshape(P, hh + 1)
    vadd = jnp.pad(vadd, ((0, 0), (0, VH - (hh + 1))))                    # (P, VH)

    slab = jnp.concatenate([ph, vadd], axis=1)                            # (P, Kx+VH)
    slab = jnp.pad(slab, ((0, P_pad - P), (0, 0))).T                      # (Kx+VH, P_pad)

    def const_spec(a):
        nd = a.ndim
        return pl.BlockSpec(a.shape, lambda i, _nd=nd: (0,) * _nd)

    warrs = [weights[k] for k in ("w_emb_sin", "w_emb_cos", "w_emb_raw",
                                  "w_hid", "b_all", "w_view", "w_rgb")]

    kernel = functools.partial(_nerf_kernel, L, H, Kx)

    out = pl.pallas_call(
        kernel,
        out_shape=jax.ShapeDtypeStruct((4, P_pad), jnp.float32),
        grid_spec=pltpu.PrefetchScalarGridSpec(
            num_scalar_prefetch=0,
            grid=(P_pad // tp,),
            in_specs=[pl.BlockSpec((Kx + VH, tp), lambda i: (0, i))]
                     + [const_spec(a) for a in warrs],
            out_specs=pl.BlockSpec((4, tp), lambda i: (0, i)),
        ),
        compiler_params=pltpu.CompilerParams(
            dimension_semantics=("parallel",)),
    )(slab, *warrs)

    out = out[:, :P]                       # drop padded tail points
    return {
        "density": out[3].reshape(n_rays, n_samples, 1),
        "feature": out[0:3].T.reshape(n_rays, n_samples, 3),
    }


# ----------------------------------------------------------------------------
# Pure-JAX f32 reference (mirrors the PyTorch module's forward exactly).
# ----------------------------------------------------------------------------
def harmonic_embedding(x, n_harmonic, omega0=1.0):
    freqs = omega0 * (2.0 ** jnp.arange(n_harmonic, dtype=jnp.float32))
    embed = (x[..., None] * freqs).reshape(*x.shape[:-1], -1)
    return jnp.concatenate([jnp.sin(embed), jnp.cos(embed), x], axis=-1)


def reference_forward(cfg, params, sample_points, directions):
    n_rays, n_samples, _ = sample_points.shape
    ep = harmonic_embedding(sample_points, cfg.n_harmonic_functions_xyz)
    ed = harmonic_embedding(directions, cfg.n_harmonic_functions_dir)
    ed = jnp.repeat(ed[:, None, :], n_samples, axis=1)

    skip_idx = cfg.n_layers_xyz // 2 + 1
    idx = 0
    x = None
    for i in range(cfg.n_layers_xyz):
        W, b = params[idx], params[idx + 1]
        idx += 2
        if i == 0:
            h = ep
        elif i == skip_idx:
            h = jnp.concatenate([x, ep], axis=-1)
        else:
            h = x
        x = h @ W + b
        if i != cfg.n_layers_xyz - 1:
            x = jnp.maximum(x, 0.0)
    W_s, b_s = params[idx], params[idx + 1]
    W_r0, b_r0 = params[idx + 2], params[idx + 3]
    W_r1, b_r1 = params[idx + 4], params[idx + 5]
    xd = jnp.concatenate([x, ed], axis=-1)
    density = jnp.maximum(xd @ W_s + b_s, 0.0)
    feature = jax.nn.sigmoid((xd @ W_r0 + b_r0) @ W_r1 + b_r1)
    return {"density": density, "feature": feature}


# ----------------------------------------------------------------------------
if __name__ == "__main__":
    cfg = SimpleNamespace(
        n_harmonic_functions_xyz=6,   # xyz embedding dim 39 (phases padded to 24 rows)
        n_harmonic_functions_dir=4,   # dir embedding dim 27 (folded per-ray)
        n_layers_xyz=6,               # skip connection at layer 4
        n_hidden_neurons_xyz=32,
    )

    key = jax.random.PRNGKey(0)
    k_pts, k_dir, k_params = jax.random.split(key, 3)

    n_rays, n_samples = 2, 8
    sample_points = jax.random.normal(k_pts, (n_rays, n_samples, 3), jnp.float32)
    directions = jax.random.normal(k_dir, (n_rays, 3), jnp.float32)

    params = init_params(cfg, k_params)

    out = neural_radiance_field(cfg, params, sample_points, directions)
    out = jax.block_until_ready(out)

    ref = reference_forward(cfg, params, sample_points, directions)
    assert out["density"].shape == (n_rays, n_samples, 1)
    assert out["feature"].shape == (n_rays, n_samples, 3)
    # bf16 matmul operands (f32 accumulation) -> loosened tolerance vs f32 ref.
    assert jnp.allclose(out["density"], ref["density"], atol=3e-2, rtol=3e-2)
    assert jnp.allclose(out["feature"], ref["feature"], atol=3e-2, rtol=3e-2)

    print("KERNEL_OK")
</pallas_src>

<mosaic_0001>
module attributes {stable_mosaic.version = 11 : i64} {
  func.func @_nerf_kernel(%arg0: i32, %arg1: memref<48x128xf32, #tpu.memory_space<vmem>>, %arg2: memref<2x32x24xbf16, #tpu.memory_space<vmem>>, %arg3: memref<2x32x24xbf16, #tpu.memory_space<vmem>>, %arg4: memref<2x32x8xbf16, #tpu.memory_space<vmem>>, %arg5: memref<5x32x32xbf16, #tpu.memory_space<vmem>>, %arg6: memref<32x7xf32, #tpu.memory_space<vmem>>, %arg7: memref<24x32xbf16, #tpu.memory_space<vmem>>, %arg8: memref<8x16xbf16, #tpu.memory_space<vmem>>, %arg9: memref<4x128xf32, #tpu.memory_space<vmem>>) attributes {dimension_semantics = [#tpu.dimension_semantics<parallel>], iteration_bounds = array<i64: 1>, scalar_prefetch = 0 : i64, scratch_operands = 0 : i64, tpu.core_type = #tpu.core_type<tc>, window_params = [{transform_indices = @transform_0, window_bounds = array<i64: 48, 128>}, {pipeline_mode = #tpu.pipeline_mode<synchronous>, transform_indices = @transform_1, window_bounds = array<i64: 2, 32, 24>}, {pipeline_mode = #tpu.pipeline_mode<synchronous>, transform_indices = @transform_2, window_bounds = array<i64: 2, 32, 24>}, {pipeline_mode = #tpu.pipeline_mode<synchronous>, transform_indices = @transform_3, window_bounds = array<i64: 2, 32, 8>}, {pipeline_mode = #tpu.pipeline_mode<synchronous>, transform_indices = @transform_4, window_bounds = array<i64: 5, 32, 32>}, {pipeline_mode = #tpu.pipeline_mode<synchronous>, transform_indices = @transform_5, window_bounds = array<i64: 32, 7>}, {pipeline_mode = #tpu.pipeline_mode<synchronous>, transform_indices = @transform_6, window_bounds = array<i64: 24, 32>}, {pipeline_mode = #tpu.pipeline_mode<synchronous>, transform_indices = @transform_7, window_bounds = array<i64: 8, 16>}, {transform_indices = @transform_8, window_bounds = array<i64: 4, 128>}]} {
    %c0 = arith.constant 0 : index
    %c0_0 = arith.constant 0 : index
    %0 = vector.load %arg1[%c0, %c0_0] : memref<48x128xf32, #tpu.memory_space<vmem>>, vector<48x128xf32>
    %1 = vector.extract_strided_slice %0 {offsets = [0, 0], sizes = [24, 128], strides = [1, 1]} : vector<48x128xf32> to vector<24x128xf32>
    %2 = vector.extract_strided_slice %0 {offsets = [24, 0], sizes = [24, 128], strides = [1, 1]} : vector<48x128xf32> to vector<24x128xf32>
    %3 = math.sin %1 : vector<24x128xf32>
    %4 = arith.truncf %3 : vector<24x128xf32> to vector<24x128xbf16>
    %5 = math.cos %1 : vector<24x128xf32>
    %6 = arith.truncf %5 : vector<24x128xf32> to vector<24x128xbf16>
    %7 = vector.extract_strided_slice %1 {offsets = [0, 0], sizes = [8, 128], strides = [1, 1]} : vector<24x128xf32> to vector<8x128xf32>
    %8 = arith.truncf %7 : vector<8x128xf32> to vector<8x128xbf16>
    %c0_1 = arith.constant 0 : index
    %c0_2 = arith.constant 0 : index
    %9 = vector.load %arg6[%c0_1, %c0_2] : memref<32x7xf32, #tpu.memory_space<vmem>>, vector<32x1xf32>
    %c0_3 = arith.constant 0 : index
    %c0_4 = arith.constant 0 : index
    %c0_5 = arith.constant 0 : index
    %10 = vector.load %arg2[%c0_3, %c0_4, %c0_5] : memref<2x32x24xbf16, #tpu.memory_space<vmem>>, vector<1x32x24xbf16>
    %11 = vector.shape_cast %10 : vector<1x32x24xbf16> to vector<32x24xbf16>
    %cst = arith.constant dense<0.000000e+00> : vector<32x128xf32>
    %12 = tpu.matmul %11, %4, %cst {dimension_numbers = #tpu.dot_dimension_numbers<[1], [0], [0], [1], [0, 0, 1, 1], [], []>} : vector<32x24xbf16>, vector<24x128xbf16>, vector<32x128xf32> -> vector<32x128xf32>
    %c0_6 = arith.constant 0 : index
    %c0_7 = arith.constant 0 : index
    %c0_8 = arith.constant 0 : index
    %13 = vector.load %arg3[%c0_6, %c0_7, %c0_8] : memref<2x32x24xbf16, #tpu.memory_space<vmem>>, vector<1x32x24xbf16>
    %14 = vector.shape_cast %13 : vector<1x32x24xbf16> to vector<32x24xbf16>
    %cst_9 = arith.constant dense<0.000000e+00> : vector<32x128xf32>
    %15 = tpu.matmul %14, %6, %cst_9 {dimension_numbers = #tpu.dot_dimension_numbers<[1], [0], [0], [1], [0, 0, 1, 1], [], []>} : vector<32x24xbf16>, vector<24x128xbf16>, vector<32x128xf32> -> vector<32x128xf32>
    %16 = arith.addf %12, %15 : vector<32x128xf32>
    %c0_10 = arith.constant 0 : index
    %c0_11 = arith.constant 0 : index
    %c0_12 = arith.constant 0 : index
    %17 = vector.load %arg4[%c0_10, %c0_11, %c0_12] : memref<2x32x8xbf16, #tpu.memory_space<vmem>>, vector<1x32x8xbf16>
    %18 = vector.shape_cast %17 : vector<1x32x8xbf16> to vector<32x8xbf16>
    %cst_13 = arith.constant dense<0.000000e+00> : vector<32x128xf32>
    %19 = tpu.matmul %18, %8, %cst_13 {dimension_numbers = #tpu.dot_dimension_numbers<[1], [0], [0], [1], [0, 0, 1, 1], [], []>} : vector<32x8xbf16>, vector<8x128xbf16>, vector<32x128xf32> -> vector<32x128xf32>
    %20 = arith.addf %16, %19 : vector<32x128xf32>
    %21 = vector.broadcast %9 : vector<32x1xf32> to vector<32x128xf32>
    %22 = arith.addf %20, %21 : vector<32x128xf32>
    %cst_14 = arith.constant 0.000000e+00 : f32
    %23 = vector.broadcast %cst_14 : f32 to vector<32x128xf32>
    %24 = arith.maximumf %22, %23 : vector<32x128xf32>
    %25 = arith.truncf %24 : vector<32x128xf32> to vector<32x128xbf16>
    %c0_15 = arith.constant 0 : index
    %c1 = arith.constant 1 : index
    %26 = vector.load %arg6[%c0_15, %c1] : memref<32x7xf32, #tpu.memory_space<vmem>>, vector<32x1xf32>
    %c0_16 = arith.constant 0 : index
    %c0_17 = arith.constant 0 : index
    %c0_18 = arith.constant 0 : index
    %27 = vector.load %arg5[%c0_16, %c0_17, %c0_18] : memref<5x32x32xbf16, #tpu.memory_space<vmem>>, vector<1x32x32xbf16>
    %28 = vector.shape_cast %27 : vector<1x32x32xbf16> to vector<32x32xbf16>
    %cst_19 = arith.constant dense<0.000000e+00> : vector<32x128xf32>
    %29 = tpu.matmul %28, %25, %cst_19 {dimension_numbers = #tpu.dot_dimension_numbers<[1], [0], [0], [1], [0, 0, 1, 1], [], []>} : vector<32x32xbf16>, vector<32x128xbf16>, vector<32x128xf32> -> vector<32x128xf32>
    %30 = vector.broadcast %26 : vector<32x1xf32> to vector<32x128xf32>
    %31 = arith.addf %29, %30 : vector<32x128xf32>
    %cst_20 = arith.constant 0.000000e+00 : f32
    %32 = vector.broadcast %cst_20 : f32 to vector<32x128xf32>
    %33 = arith.maximumf %31, %32 : vector<32x128xf32>
    %34 = arith.truncf %33 : vector<32x128xf32> to vector<32x128xbf16>
    %c0_21 = arith.constant 0 : index
    %c2 = arith.constant 2 : index
    %35 = vector.load %arg6[%c0_21, %c2] : memref<32x7xf32, #tpu.memory_space<vmem>>, vector<32x1xf32>
    %c1_22 = arith.constant 1 : index
    %c0_23 = arith.constant 0 : index
    %c0_24 = arith.constant 0 : index
    %36 = vector.load %arg5[%c1_22, %c0_23, %c0_24] : memref<5x32x32xbf16, #tpu.memory_space<vmem>>, vector<1x32x32xbf16>
    %37 = vector.shape_cast %36 : vector<1x32x32xbf16> to vector<32x32xbf16>
    %cst_25 = arith.constant dense<0.000000e+00> : vector<32x128xf32>
    %38 = tpu.matmul %37, %34, %cst_25 {dimension_numbers = #tpu.dot_dimension_numbers<[1], [0], [0], [1], [0, 0, 1, 1], [], []>} : vector<32x32xbf16>, vector<32x128xbf16>, vector<32x128xf32> -> vector<32x128xf32>
    %39 = vector.broadcast %35 : vector<32x1xf32> to vector<32x128xf32>
    %40 = arith.addf %38, %39 : vector<32x128xf32>
    %cst_26 = arith.constant 0.000000e+00 : f32
    %41 = vector.broadcast %cst_26 : f32 to vector<32x128xf32>
    %42 = arith.maximumf %40, %41 : vector<32x128xf32>
    %43 = arith.truncf %42 : vector<32x128xf32> to vector<32x128xbf16>
    %c0_27 = arith.constant 0 : index
    %c3 = arith.constant 3 : index
    %44 = vector.load %arg6[%c0_27, %c3] : memref<32x7xf32, #tpu.memory_space<vmem>>, vector<32x1xf32>
    %c2_28 = arith.constant 2 : index
    %c0_29 = arith.constant 0 : index
    %c0_30 = arith.constant 0 : index
    %45 = vector.load %arg5[%c2_28, %c0_29, %c0_30] : memref<5x32x32xbf16, #tpu.memory_space<vmem>>, vector<1x32x32xbf16>
    %46 = vector.shape_cast %45 : vector<1x32x32xbf16> to vector<32x32xbf16>
    %cst_31 = arith.constant dense<0.000000e+00> : vector<32x128xf32>
    %47 = tpu.matmul %46, %43, %cst_31 {dimension_numbers = #tpu.dot_dimension_numbers<[1], [0], [0], [1], [0, 0, 1, 1], [], []>} : vector<32x32xbf16>, vector<32x128xbf16>, vector<32x128xf32> -> vector<32x128xf32>
    %48 = vector.broadcast %44 : vector<32x1xf32> to vector<32x128xf32>
    %49 = arith.addf %47, %48 : vector<32x128xf32>
    %cst_32 = arith.constant 0.000000e+00 : f32
    %50 = vector.broadcast %cst_32 : f32 to vector<32x128xf32>
    %51 = arith.maximumf %49, %50 : vector<32x128xf32>
    %52 = arith.truncf %51 : vector<32x128xf32> to vector<32x128xbf16>
    %c0_33 = arith.constant 0 : index
    %c4 = arith.constant 4 : index
    %53 = vector.load %arg6[%c0_33, %c4] : memref<32x7xf32, #tpu.memory_space<vmem>>, vector<32x1xf32>
    %c3_34 = arith.constant 3 : index
    %c0_35 = arith.constant 0 : index
    %c0_36 = arith.constant 0 : index
    %54 = vector.load %arg5[%c3_34, %c0_35, %c0_36] : memref<5x32x32xbf16, #tpu.memory_space<vmem>>, vector<1x32x32xbf16>
    %55 = vector.shape_cast %54 : vector<1x32x32xbf16> to vector<32x32xbf16>
    %cst_37 = arith.constant dense<0.000000e+00> : vector<32x128xf32>
    %56 = tpu.matmul %55, %52, %cst_37 {dimension_numbers = #tpu.dot_dimension_numbers<[1], [0], [0], [1], [0, 0, 1, 1], [], []>} : vector<32x32xbf16>, vector<32x128xbf16>, vector<32x128xf32> -> vector<32x128xf32>
    %c1_38 = arith.constant 1 : index
    %c0_39 = arith.constant 0 : index
    %c0_40 = arith.constant 0 : index
    %57 = vector.load %arg2[%c1_38, %c0_39, %c0_40] : memref<2x32x24xbf16, #tpu.memory_space<vmem>>, vector<1x32x24xbf16>
    %58 = vector.shape_cast %57 : vector<1x32x24xbf16> to vector<32x24xbf16>
    %cst_41 = arith.constant dense<0.000000e+00> : vector<32x128xf32>
    %59 = tpu.matmul %58, %4, %cst_41 {dimension_numbers = #tpu.dot_dimension_numbers<[1], [0], [0], [1], [0, 0, 1, 1], [], []>} : vector<32x24xbf16>, vector<24x128xbf16>, vector<32x128xf32> -> vector<32x128xf32>
    %c1_42 = arith.constant 1 : index
    %c0_43 = arith.constant 0 : index
    %c0_44 = arith.constant 0 : index
    %60 = vector.load %arg3[%c1_42, %c0_43, %c0_44] : memref<2x32x24xbf16, #tpu.memory_space<vmem>>, vector<1x32x24xbf16>
    %61 = vector.shape_cast %60 : vector<1x32x24xbf16> to vector<32x24xbf16>
    %cst_45 = arith.constant dense<0.000000e+00> : vector<32x128xf32>
    %62 = tpu.matmul %61, %6, %cst_45 {dimension_numbers = #tpu.dot_dimension_numbers<[1], [0], [0], [1], [0, 0, 1, 1], [], []>} : vector<32x24xbf16>, vector<24x128xbf16>, vector<32x128xf32> -> vector<32x128xf32>
    %63 = arith.addf %59, %62 : vector<32x128xf32>
    %c1_46 = arith.constant 1 : index
    %c0_47 = arith.constant 0 : index
    %c0_48 = arith.constant 0 : index
    %64 = vector.load %arg4[%c1_46, %c0_47, %c0_48] : memref<2x32x8xbf16, #tpu.memory_space<vmem>>, vector<1x32x8xbf16>
    %65 = vector.shape_cast %64 : vector<1x32x8xbf16> to vector<32x8xbf16>
    %cst_49 = arith.constant dense<0.000000e+00> : vector<32x128xf32>
    %66 = tpu.matmul %65, %8, %cst_49 {dimension_numbers = #tpu.dot_dimension_numbers<[1], [0], [0], [1], [0, 0, 1, 1], [], []>} : vector<32x8xbf16>, vector<8x128xbf16>, vector<32x128xf32> -> vector<32x128xf32>
    %67 = arith.addf %63, %66 : vector<32x128xf32>
    %68 = arith.addf %56, %67 : vector<32x128xf32>
    %69 = vector.broadcast %53 : vector<32x1xf32> to vector<32x128xf32>
    %70 = arith.addf %68, %69 : vector<32x128xf32>
    %cst_50 = arith.constant 0.000000e+00 : f32
    %71 = vector.broadcast %cst_50 : f32 to vector<32x128xf32>
    %72 = arith.maximumf %70, %71 : vector<32x128xf32>
    %73 = arith.truncf %72 : vector<32x128xf32> to vector<32x128xbf16>
    %c0_51 = arith.constant 0 : index
    %c5 = arith.constant 5 : index
    %74 = vector.load %arg6[%c0_51, %c5] : memref<32x7xf32, #tpu.memory_space<vmem>>, vector<32x1xf32>
    %c4_52 = arith.constant 4 : index
    %c0_53 = arith.constant 0 : index
    %c0_54 = arith.constant 0 : index
    %75 = vector.load %arg5[%c4_52, %c0_53, %c0_54] : memref<5x32x32xbf16, #tpu.memory_space<vmem>>, vector<1x32x32xbf16>
    %76 = vector.shape_cast %75 : vector<1x32x32xbf16> to vector<32x32xbf16>
    %cst_55 = arith.constant dense<0.000000e+00> : vector<32x128xf32>
    %77 = tpu.matmul %76, %73, %cst_55 {dimension_numbers = #tpu.dot_dimension_numbers<[1], [0], [0], [1], [0, 0, 1, 1], [], []>} : vector<32x32xbf16>, vector<32x128xbf16>, vector<32x128xf32> -> vector<32x128xf32>
    %78 = vector.broadcast %74 : vector<32x1xf32> to vector<32x128xf32>
    %79 = arith.addf %77, %78 : vector<32x128xf32>
    %80 = arith.truncf %79 : vector<32x128xf32> to vector<32x128xbf16>
    %c0_56 = arith.constant 0 : index
    %c0_57 = arith.constant 0 : index
    %81 = vector.load %arg7[%c0_56, %c0_57] : memref<24x32xbf16, #tpu.memory_space<vmem>>, vector<24x32xbf16>
    %cst_58 = arith.constant dense<0.000000e+00> : vector<24x128xf32>
    %82 = tpu.matmul %81, %80, %cst_58 {dimension_numbers = #tpu.dot_dimension_numbers<[1], [0], [0], [1], [0, 0, 1, 1], [], []>} : vector<24x32xbf16>, vector<32x128xbf16>, vector<24x128xf32> -> vector<24x128xf32>
    %83 = arith.addf %82, %2 : vector<24x128xf32>
    %84 = vector.extract_strided_slice %83 {offsets = [16, 0], sizes = [1, 128], strides = [1, 1]} : vector<24x128xf32> to vector<1x128xf32>
    %cst_59 = arith.constant 0.000000e+00 : f32
    %85 = vector.broadcast %cst_59 : f32 to vector<1x128xf32>
    %86 = arith.maximumf %84, %85 : vector<1x128xf32>
    %87 = vector.extract_strided_slice %83 {offsets = [0, 0], sizes = [16, 128], strides = [1, 1]} : vector<24x128xf32> to vector<16x128xf32>
    %88 = arith.truncf %87 : vector<16x128xf32> to vector<16x128xbf16>
    %c0_60 = arith.constant 0 : index
    %c6 = arith.constant 6 : index
    %89 = vector.load %arg6[%c0_60, %c6] : memref<32x7xf32, #tpu.memory_space<vmem>>, vector<8x1xf32>
    %c0_61 = arith.constant 0 : index
    %c0_62 = arith.constant 0 : index
    %90 = vector.load %arg8[%c0_61, %c0_62] : memref<8x16xbf16, #tpu.memory_space<vmem>>, vector<8x16xbf16>
    %cst_63 = arith.constant dense<0.000000e+00> : vector<8x128xf32>
    %91 = tpu.matmul %90, %88, %cst_63 {dimension_numbers = #tpu.dot_dimension_numbers<[1], [0], [0], [1], [0, 0, 1, 1], [], []>} : vector<8x16xbf16>, vector<16x128xbf16>, vector<8x128xf32> -> vector<8x128xf32>
    %92 = vector.broadcast %89 : vector<8x1xf32> to vector<8x128xf32>
    %93 = arith.addf %91, %92 : vector<8x128xf32>
    %94 = vector.extract_strided_slice %93 {offsets = [0, 0], sizes = [3, 128], strides = [1, 1]} : vector<8x128xf32> to vector<3x128xf32>
    %cst_64 = arith.constant 5.000000e-01 : f32
    %95 = vector.broadcast %cst_64 : f32 to vector<3x128xf32>
    %96 = arith.mulf %95, %94 : vector<3x128xf32>
    %97 = math.tanh %96 : vector<3x128xf32>
    %cst_65 = arith.constant 1.000000e+00 : f32
    %98 = vector.broadcast %cst_65 : f32 to vector<3x128xf32>
    %99 = arith.addf %97, %98 : vector<3x128xf32>
    %cst_66 = arith.constant 5.000000e-01 : f32
    %100 = vector.broadcast %cst_66 : f32 to vector<3x128xf32>
    %101 = arith.mulf %100, %99 : vector<3x128xf32>
    %c0_67 = arith.constant 0 : index
    %c0_68 = arith.constant 0 : index
    %102 = vector.load %arg9[%c0_67, %c0_68] : memref<4x128xf32, #tpu.memory_space<vmem>>, vector<3x128xf32>
    tpu.vector_store %arg9[%c0_67, %c0_68], %101 {strides = array<i32>} : memref<4x128xf32, #tpu.memory_space<vmem>>, vector<3x128xf32>,
    %c3_69 = arith.constant 3 : index
    %c0_70 = arith.constant 0 : index
    %103 = vector.load %arg9[%c3_69, %c0_70] : memref<4x128xf32, #tpu.memory_space<vmem>>, vector<1x128xf32>
    tpu.vector_store %arg9[%c3_69, %c0_70], %86 {strides = array<i32>} : memref<4x128xf32, #tpu.memory_space<vmem>>, vector<1x128xf32>,
    return
  }
  func.func @transform_0(%arg0: i32) -> (i32, i32) {
    %c0_i32 = arith.constant 0 : i32
    %c0_i32_0 = arith.constant 0 : i32
    return %c0_i32, %arg0 : i32, i32
  }
  func.func @transform_1(%arg0: i32) -> (i32, i32, i32) {
    %c0_i32 = arith.constant 0 : i32
    %c0_i32_0 = arith.constant 0 : i32
    %c0_i32_1 = arith.constant 0 : i32
    %c0_i32_2 = arith.constant 0 : i32
    return %c0_i32, %c0_i32_0, %c0_i32_1 : i32, i32, i32
  }
  func.func @transform_2(%arg0: i32) -> (i32, i32, i32) {
    %c0_i32 = arith.constant 0 : i32
    %c0_i32_0 = arith.constant 0 : i32
    %c0_i32_1 = arith.constant 0 : i32
    %c0_i32_2 = arith.constant 0 : i32
    return %c0_i32, %c0_i32_0, %c0_i32_1 : i32, i32, i32
  }
  func.func @transform_3(%arg0: i32) -> (i32, i32, i32) {
    %c0_i32 = arith.constant 0 : i32
    %c0_i32_0 = arith.constant 0 : i32
    %c0_i32_1 = arith.constant 0 : i32
    %c0_i32_2 = arith.constant 0 : i32
    return %c0_i32, %c0_i32_0, %c0_i32_1 : i32, i32, i32
  }
  func.func @transform_4(%arg0: i32) -> (i32, i32, i32) {
    %c0_i32 = arith.constant 0 : i32
    %c0_i32_0 = arith.constant 0 : i32
    %c0_i32_1 = arith.constant 0 : i32
    %c0_i32_2 = arith.constant 0 : i32
    return %c0_i32, %c0_i32_0, %c0_i32_1 : i32, i32, i32
  }
  func.func @transform_5(%arg0: i32) -> (i32, i32) {
    %c0_i32 = arith.constant 0 : i32
    %c0_i32_0 = arith.constant 0 : i32
    %c0_i32_1 = arith.constant 0 : i32
    return %c0_i32, %c0_i32_0 : i32, i32
  }
  func.func @transform_6(%arg0: i32) -> (i32, i32) {
    %c0_i32 = arith.constant 0 : i32
    %c0_i32_0 = arith.constant 0 : i32
    %c0_i32_1 = arith.constant 0 : i32
    return %c0_i32, %c0_i32_0 : i32, i32
  }
  func.func @transform_7(%arg0: i32) -> (i32, i32) {
    %c0_i32 = arith.constant 0 : i32
    %c0_i32_0 = arith.constant 0 : i32
    %c0_i32_1 = arith.constant 0 : i32
    return %c0_i32, %c0_i32_0 : i32, i32
  }
  func.func @transform_8(%arg0: i32) -> (i32, i32) {
    %c0_i32 = arith.constant 0 : i32
    %c0_i32_0 = arith.constant 0 : i32
    return %c0_i32, %arg0 : i32, i32
  }
}

</mosaic_0001>

<llo_original>
// kernel: tpu_custom_call.1
$region0: #{tpu_custom_call.1}
  #allocation0 [shape = 'u32[]', space=smem, size = 0x4, offset = 0x4, fixed_abs, tag = 'smem constant byte address 0x4 - core index']
  #allocation1 [shape = 'u32[144,128]{1,0:T(1,128)}', space=vmem, size = 0x12000, scoped, tag = 'internal scratch']
  %s0 = inlined_call_operand.vmem [shape: f32[48,128], index: 0, kind: input, shape index: {}]
  %s1 = inlined_call_operand.vmem [shape: bf16[2,32,24], index: 1, kind: input, shape index: {}]
  %s2 = inlined_call_operand.vmem [shape: bf16[2,32,24], index: 2, kind: input, shape index: {}]
  %s3 = inlined_call_operand.vmem [shape: bf16[2,32,8], index: 3, kind: input, shape index: {}]
  %s4 = inlined_call_operand.vmem [shape: bf16[5,32,32], index: 4, kind: input, shape index: {}]
  %s5 = inlined_call_operand.vmem [shape: f32[32,7], index: 5, kind: input, shape index: {}]
  %s6 = inlined_call_operand.vmem [shape: bf16[24,32], index: 6, kind: input, shape index: {}]
  %s7 = inlined_call_operand.vmem [shape: bf16[8,16], index: 7, kind: input, shape index: {}]
  %s8 = inlined_call_operand.hbm [shape: f32[4,128], index: 8, kind: output, shape index: {}]
  %s9 = sld [smem:[#allocation0]]
  $region42: #{tpu_custom_call.1} parent=0
    _
  %s11 = ssub.s32 1, %s9
  %s12 = scalar_select 0, %s11, %s9
  $region1: #{tpu_custom_call.1} parent=0
    #allocation2 [shape = 'u8[2048]{0}', space=vmem, size = 0x800, scoped, tag = 'output window, operand 0, single buffered']
    #allocation3 [shape = 's32[1]{0}', space=sflag, size = 0x4, scoped, tag = 'scoped memory for tpu_custom_call.1']
    %13 = vsyncpa [#allocation3], 0
    // Predicated region
    $region2: #{tpu_custom_call.1} parent=1 // pred_check
      _
    $region3: #{tpu_custom_call.1} parent=1 // pred_check_branch
      %15 = sbr.rel (0) target = $region5
    $region4: #{tpu_custom_call.1} parent=1 // pred_region
      _
    $region5: #{tpu_custom_call.1} parent=1 // pred_fallthru
      _
    // Predicated region
    $region6: #{tpu_custom_call.1} parent=1 // pred_check
      _
    $region7: #{tpu_custom_call.1} parent=1 // pred_check_branch
      %17 = sbr.rel (0) target = $region9
    $region8: #{tpu_custom_call.1} parent=1 // pred_region
      _
    $region9: #{tpu_custom_call.1} parent=1 // pred_fallthru
      _
    // Predicated region
    $region10: #{tpu_custom_call.1} parent=1 // pred_check
      _
    $region11: #{tpu_custom_call.1} parent=1 // pred_check_branch
      %19 = sbr.rel (0) target = $region13
    $region12: #{tpu_custom_call.1} parent=1 // pred_region
      _
    $region13: #{tpu_custom_call.1} parent=1 // pred_fallthru
      _
    // Predicated region
    $region14: #{tpu_custom_call.1} parent=1 // pred_check
      _
    $region15: #{tpu_custom_call.1} parent=1 // pred_check_branch
      %21 = sbr.rel (0) target = $region17
    $region16: #{tpu_custom_call.1} parent=1 // pred_region
      _
    $region17: #{tpu_custom_call.1} parent=1 // pred_fallthru
      _
    // Predicated region
    $region18: #{tpu_custom_call.1} parent=1 // pred_check
      _
    $region19: #{tpu_custom_call.1} parent=1 // pred_check_branch
      %23 = sbr.rel (0) target = $region21
    $region20: #{tpu_custom_call.1} parent=1 // pred_region
      _
    $region21: #{tpu_custom_call.1} parent=1 // pred_fallthru
      _
    // Predicated region
    $region22: #{tpu_custom_call.1} parent=1 // pred_check
      _
    $region23: #{tpu_custom_call.1} parent=1 // pred_check_branch
      %25 = sbr.rel (0) target = $region25
    $region24: #{tpu_custom_call.1} parent=1 // pred_region
      _
    $region25: #{tpu_custom_call.1} parent=1 // pred_fallthru
      _
    // Predicated region
    $region26: #{tpu_custom_call.1} parent=1 // pred_check
      _
    $region27: #{tpu_custom_call.1} parent=1 // pred_check_branch
      %27 = sbr.rel (0) target = $region29
    $region28: #{tpu_custom_call.1} parent=1 // pred_region
      _
    $region29: #{tpu_custom_call.1} parent=1 // pred_fallthru
      _
    // Predicated region
    $region30: #{tpu_custom_call.1} parent=1 // pred_check
      _
    $region31: #{tpu_custom_call.1} parent=1 // pred_check_branch
      %29 = sbr.rel (0) target = $region33
    $region32: #{tpu_custom_call.1} parent=1 // pred_region
      _
    $region33: #{tpu_custom_call.1} parent=1 // pred_fallthru
      _
    %v31 = vld [vmem:[%s0] sm:$0xff]
    %v32 = vld [vmem:[%s0 + $0x8] sm:$0xff]
    %v33 = vld [vmem:[%s0 + $0x10] sm:$0xff]
    %v34 = vld [vmem:[%s0 + $0x18] sm:$0xff]
    %v35 = vld [vmem:[%s0 + $0x20] sm:$0xff]
    %v36 = vld [vmem:[%s0 + $0x28] sm:$0xff]
    %v37 = vand.u32 2147483647, %v31
    %vm38 = vcmp.le.f32.partialorder %v37, 0.7853982
    %vm39 = vcmp.lt.s32.totalorder %v31, 0
    %v40 = vand.u32 %v31, 2139095040
    %v41 = vshrl.u32 %v40, 23
    %v42 = vsub.s32 %v41, 127
    %v43 = vand.u32 2147483647, %v31
    %v44 = vand.u32 %v43, 8388607
    %v45 = vor.u32 %v44, 8388608
    %v46 = vsub.s32 0, %v45
    %v47 = vadd.s32 %v42, 1
    %vm48 = vcmp.gt.s32.totalorder %v47, 0
    %v49 = vsel %vm48, %v47, 0
    %v50 = vshrl.u32 %v49, 5
    %v51 = vand.u32 %v49, 31
    %v52 = vsub.s32 32, %v51
    %v53 = vshrl.u32 683565275, %v52
    %v54 = vshll.u32 683565275, %v51
    %v55 = vshrl.u32 2475754826, %v52
    %v56 = vor.u32 %v54, %v55
    %v57 = vshll.u32 2475754826, %v51
    %v58 = vshrl.u32 2131351028, %v52
    %v59 = vor.u32 %v57, %v58
    %v60 = vshll.u32 2131351028, %v51
    %v61 = vshrl.u32 2102212464, %v52
    %v62 = vor.u32 %v60, %v61
    %v63 = vshll.u32 2102212464, %v51
    %v64 = vshrl.u32 920167782, %v52
    %v65 = vor.u32 %v63, %v64
    %v66 = vshll.u32 920167782, %v51
    %v67 = vshrl.u32 1326507024, %v52
    %v68 = vor.u32 %v66, %v67
    %vm69 = vcmp.lt.s32.totalorder %v50, 1
    %vm70 = vcmp.lt.s32.totalorder %v50, 2
    %vm71 = vcmp.lt.s32.totalorder %v50, 3
    %vm72 = vcmp.lt.s32.totalorder %v50, 4
    %v73 = vsel %vm69, %v53, %v56
    %v74 = vsel %vm72, %v62, 2102212464
    %v75 = vsel %vm71, %v59, %v74
    %v76 = vsel %vm70, %v73, %v75
    %v77 = vsel %vm69, %v56, %v59
    %v78 = vsel %vm72, %v65, 920167782
    %v79 = vsel %vm71, %v62, %v78
    %v80 = vsel %vm70, %v77, %v79
    %v81 = vsel %vm69, %v59, %v62
    %v82 = vsel %vm72, %v68, 1326507024
    %v83 = vsel %vm71, %v65, %v82
    %v84 = vsel %vm70, %v81, %v83
    %v85 = vshll.u32 %v45, 8
    %v86 = vmul.u32.u64.compose %v85, %v84
    %v87 = vextract.low.u32 %v86
    %v88 = vextract.high.u32 %v86
    %v89 = vmul.u32.u64.compose %v85, %v80
    %v90 = vextract.low.u32 %v89
    %v91 = vextract.high.u32 %v89
    %v92 = vmul.u32 %v85, %v76
    %v93 = vadd.s32 %v88, %v90
    %vm94 = vc.u32 %v88, %v90
    %v95 = vadd.s32 %v91, 1
    %v96 = vsel %vm94, %v95, %v91
    %v97 = vadd.s32 %v92, %v96
    %v98 = vadd.s32 %v97, 536870912
    %v99 = vshrl.u32 %v98, 30
    %v100 = vshll.u32 %v99, 30
    %v101 = vsub.s32 %v97, %v100
    %vm102 = vcmp.lt.s32.totalorder %v101, 0
    %v103 = vsub.s32 0, %v101
    %v104 = vsel %vm102, %v103, %v101
    %v105 = vclz %v104
    %v106 = vsub.s32 %v105, 2
    %vm107 = vcmp.gt.s32.totalorder 0, %v106
    %v108 = vsel %vm107, 0, %v106
    %v109 = vsub.s32 32, %v108
    %v110 = vshll.u32 %v101, %v108
    %v111 = vshrl.u32 %v93, %v109
    %v112 = vor.u32 %v110, %v111
    %v113 = vsub.s32 4294967266, %v108
    %v114 = vadd.s32 %v113, 127
    %v115 = vshll.u32 %v114, 23
    %v116 = vor.u32 4788187, %v115
    %v117 = vand.u32 2147483647, %v116
    %v119 = vcvt.s32.f32 %v112
    %v120 = vmul.f32 %v119, %v117
    %v121 = vxor.u32 %v120, 2147483648
    %v122 = vsel %vm39, %v121, %v120
    %v123 = vsub.s32 4, %v99
    %v124 = vsel %vm39, %v123, %v99
    %v125 = vsel %vm38, %v31, %v122
    %v126 = vsel %vm38, 0, %v124
    %v127 = vcosq.f32.pop %v125
    %v128 = vsinq.f32.pop %v125
    %vm129 = vweird.f32 %v31
    %v130 = vadd.s32 %v126, 3
    %v131 = vand.u32 %v130, 3
    %vm132 = vcmp.lt.s32.totalorder %v131, 2
    %vm133 = vcmp.eq.s32.totalorder %v131, 0
    %v134 = vxor.u32 %v128, 2147483648
    %v135 = vsel %vm133, %v127, %v134
    %vm136 = vcmp.eq.s32.totalorder %v131, 2
    %v137 = vxor.u32 %v127, 2147483648
    %v138 = vsel %vm136, %v137, %v128
    %v139 = vsel %vm132, %v135, %v138
    %v140 = vsel %vm129, nan, %v139
    %v141 = vand.u32 2147483647, %v32
    %vm142 = vcmp.le.f32.partialorder %v141, 0.7853982
    %vm143 = vcmp.lt.s32.totalorder %v32, 0
    %v144 = vand.u32 %v32, 2139095040
    %v145 = vshrl.u32 %v144, 23
    %v146 = vsub.s32 %v145, 127
    %v147 = vand.u32 2147483647, %v32
    %v148 = vand.u32 %v147, 8388607
    %v149 = vor.u32 %v148, 8388608
    %v150 = vsub.s32 0, %v149
    %v151 = vadd.s32 %v146, 1
    %vm152 = vcmp.gt.s32.totalorder %v151, 0
    %v153 = vsel %vm152, %v151, 0
    %v154 = vshrl.u32 %v153, 5
    %v155 = vand.u32 %v153, 31
    %v156 = vsub.s32 32, %v155
    %v157 = vshrl.u32 683565275, %v156
    %v158 = vshll.u32 683565275, %v155
    %v159 = vshrl.u32 2475754826, %v156
    %v160 = vor.u32 %v158, %v159
    %v161 = vshll.u32 2475754826, %v155
    %v162 = vshrl.u32 2131351028, %v156
    %v163 = vor.u32 %v161, %v162
    %v164 = vshll.u32 2131351028, %v155
    %v165 = vshrl.u32 2102212464, %v156
    %v166 = vor.u32 %v164, %v165
    %v167 = vshll.u32 2102212464, %v155
    %v168 = vshrl.u32 920167782, %v156
    %v169 = vor.u32 %v167, %v168
    %v170 = vshll.u32 920167782, %v155
    %v171 = vshrl.u32 1326507024, %v156
    %v172 = vor.u32 %v170, %v171
    %vm173 = vcmp.lt.s32.totalorder %v154, 1
    %vm174 = vcmp.lt.s32.totalorder %v154, 2
    %vm175 = vcmp.lt.s32.totalorder %v154, 3
    %vm176 = vcmp.lt.s32.totalorder %v154, 4
    %v177 = vsel %vm173, %v157, %v160
    %v178 = vsel %vm176, %v166, 2102212464
    %v179 = vsel %vm175, %v163, %v178
    %v180 = vsel %vm174, %v177, %v179
    %v181 = vsel %vm173, %v160, %v163
    %v182 = vsel %vm176, %v169, 920167782
    %v183 = vsel %vm175, %v166, %v182
    %v184 = vsel %vm174, %v181, %v183
    %v185 = vsel %vm173, %v163, %v166
    %v186 = vsel %vm176, %v172, 1326507024
    %v187 = vsel %vm175, %v169, %v186
    %v188 = vsel %vm174, %v185, %v187
    %v189 = vshll.u32 %v149, 8
    %v190 = vmul.u32.u64.compose %v189, %v188
    %v191 = vextract.low.u32 %v190
    %v192 = vextract.high.u32 %v190
    %v193 = vmul.u32.u64.compose %v189, %v184
    %v194 = vextract.low.u32 %v193
    %v195 = vextract.high.u32 %v193
    %v196 = vmul.u32 %v189, %v180
    %v197 = vadd.s32 %v192, %v194
    %vm198 = vc.u32 %v192, %v194
    %v199 = vadd.s32 %v195, 1
    %v200 = vsel %vm198, %v199, %v195
    %v201 = vadd.s32 %v196, %v200
    %v202 = vadd.s32 %v201, 536870912
    %v203 = vshrl.u32 %v202, 30
    %v204 = vshll.u32 %v203, 30
    %v205 = vsub.s32 %v201, %v204
    %vm206 = vcmp.lt.s32.totalorder %v205, 0
    %v207 = vsub.s32 0, %v205
    %v208 = vsel %vm206, %v207, %v205
    %v209 = vclz %v208
    %v210 = vsub.s32 %v209, 2
    %vm211 = vcmp.gt.s32.totalorder 0, %v210
    %v212 = vsel %vm211, 0, %v210
    %v213 = vsub.s32 32, %v212
    %v214 = vshll.u32 %v205, %v212
    %v215 = vshrl.u32 %v197, %v213
    %v216 = vor.u32 %v214, %v215
    %v217 = vsub.s32 4294967266, %v212
    %v218 = vadd.s32 %v217, 127
    %v219 = vshll.u32 %v218, 23
    %v220 = vor.u32 4788187, %v219
    %v221 = vand.u32 2147483647, %v220
    %v223 = vcvt.s32.f32 %v216
    %v224 = vmul.f32 %v223, %v221
    %v225 = vxor.u32 %v224, 2147483648
    %v226 = vsel %vm143, %v225, %v224
    %v227 = vsub.s32 4, %v203
    %v228 = vsel %vm143, %v227, %v203
    %v229 = vsel %vm142, %v32, %v226
    %v230 = vsel %vm142, 0, %v228
    %v231 = vcosq.f32.pop %v229
    %v232 = vsinq.f32.pop %v229
    %vm233 = vweird.f32 %v32
    %v234 = vadd.s32 %v230, 3
    %v235 = vand.u32 %v234, 3
    %vm236 = vcmp.lt.s32.totalorder %v235, 2
    %vm237 = vcmp.eq.s32.totalorder %v235, 0
    %v238 = vxor.u32 %v232, 2147483648
    %v239 = vsel %vm237, %v231, %v238
    %vm240 = vcmp.eq.s32.totalorder %v235, 2
    %v241 = vxor.u32 %v231, 2147483648
    %v242 = vsel %vm240, %v241, %v232
    %v243 = vsel %vm236, %v239, %v242
    %v244 = vsel %vm233, nan, %v243
    %v245 = vand.u32 2147483647, %v33
    %vm246 = vcmp.le.f32.partialorder %v245, 0.7853982
    %vm247 = vcmp.lt.s32.totalorder %v33, 0
    %v248 = vand.u32 %v33, 2139095040
    %v249 = vshrl.u32 %v248, 23
    %v250 = vsub.s32 %v249, 127
    %v251 = vand.u32 2147483647, %v33
    %v252 = vand.u32 %v251, 8388607
    %v253 = vor.u32 %v252, 8388608
    %v254 = vsub.s32 0, %v253
    %v255 = vadd.s32 %v250, 1
    %vm256 = vcmp.gt.s32.totalorder %v255, 0
    %v257 = vsel %vm256, %v255, 0
    %v258 = vshrl.u32 %v257, 5
    %v259 = vand.u32 %v257, 31
    %v260 = vsub.s32 32, %v259
    %v261 = vshrl.u32 683565275, %v260
    %v262 = vshll.u32 683565275, %v259
    %v263 = vshrl.u32 2475754826, %v260
    %v264 = vor.u32 %v262, %v263
    %v265 = vshll.u32 2475754826, %v259
    %v266 = vshrl.u32 2131351028, %v260
    %v267 = vor.u32 %v265, %v266
    %v268 = vshll.u32 2131351028, %v259
    %v269 = vshrl.u32 2102212464, %v260
    %v270 = vor.u32 %v268, %v269
    %v271 = vshll.u32 2102212464, %v259
    %v272 = vshrl.u32 920167782, %v260
    %v273 = vor.u32 %v271, %v272
    %v274 = vshll.u32 920167782, %v259
    %v275 = vshrl.u32 1326507024, %v260
    %v276 = vor.u32 %v274, %v275
    %vm277 = vcmp.lt.s32.totalorder %v258, 1
    %vm278 = vcmp.lt.s32.totalorder %v258, 2
    %vm279 = vcmp.lt.s32.totalorder %v258, 3
    %vm280 = vcmp.lt.s32.totalorder %v258, 4
    %v281 = vsel %vm277, %v261, %v264
    %v282 = vsel %vm280, %v270, 2102212464
    %v283 = vsel %vm279, %v267, %v282
    %v284 = vsel %vm278, %v281, %v283
    %v285 = vsel %vm277, %v264, %v267
    %v286 = vsel %vm280, %v273, 920167782
    %v287 = vsel %vm279, %v270, %v286
    %v288 = vsel %vm278, %v285, %v287
    %v289 = vsel %vm277, %v267, %v270
    %v290 = vsel %vm280, %v276, 1326507024
    %v291 = vsel %vm279, %v273, %v290
    %v292 = vsel %vm278, %v289, %v291
    %v293 = vshll.u32 %v253, 8
    %v294 = vmul.u32.u64.compose %v293, %v292
    %v295 = vextract.low.u32 %v294
    %v296 = vextract.high.u32 %v294
    %v297 = vmul.u32.u64.compose %v293, %v288
    %v298 = vextract.low.u32 %v297
    %v299 = vextract.high.u32 %v297
    %v300 = vmul.u32 %v293, %v284
    %v301 = vadd.s32 %v296, %v298
    %vm302 = vc.u32 %v296, %v298
    %v303 = vadd.s32 %v299, 1
    %v304 = vsel %vm302, %v303, %v299
    %v305 = vadd.s32 %v300, %v304
    %v306 = vadd.s32 %v305, 536870912
    %v307 = vshrl.u32 %v306, 30
    %v308 = vshll.u32 %v307, 30
    %v309 = vsub.s32 %v305, %v308
    %vm310 = vcmp.lt.s32.totalorder %v309, 0
    %v311 = vsub.s32 0, %v309
    %v312 = vsel %vm310, %v311, %v309
    %v313 = vclz %v312
    %v314 = vsub.s32 %v313, 2
    %vm315 = vcmp.gt.s32.totalorder 0, %v314
    %v316 = vsel %vm315, 0, %v314
    %v317 = vsub.s32 32, %v316
    %v318 = vshll.u32 %v309, %v316
    %v319 = vshrl.u32 %v301, %v317
    %v320 = vor.u32 %v318, %v319
    %v321 = vsub.s32 4294967266, %v316
    %v322 = vadd.s32 %v321, 127
    %v323 = vshll.u32 %v322, 23
    %v324 = vor.u32 4788187, %v323
    %v325 = vand.u32 2147483647, %v324
    %v327 = vcvt.s32.f32 %v320
    %v328 = vmul.f32 %v327, %v325
    %v329 = vxor.u32 %v328, 2147483648
    %v330 = vsel %vm247, %v329, %v328
    %v331 = vsub.s32 4, %v307
    %v332 = vsel %vm247, %v331, %v307
    %v333 = vsel %vm246, %v33, %v330
    %v334 = vsel %vm246, 0, %v332
    %v335 = vcosq.f32.pop %v333
    %v336 = vsinq.f32.pop %v333
    %vm337 = vweird.f32 %v33
    %v338 = vadd.s32 %v334, 3
    %v339 = vand.u32 %v338, 3
    %vm340 = vcmp.lt.s32.totalorder %v339, 2
    %vm341 = vcmp.eq.s32.totalorder %v339, 0
    %v342 = vxor.u32 %v336, 2147483648
    %v343 = vsel %vm341, %v335, %v342
    %vm344 = vcmp.eq.s32.totalorder %v339, 2
    %v345 = vxor.u32 %v335, 2147483648
    %v346 = vsel %vm344, %v345, %v336
    %v347 = vsel %vm340, %v343, %v346
    %v348 = vsel %vm337, nan, %v347
    %v349 = vpack.c.bf16 %v244, %v140
    %v350 = vpack.c.bf16 %v348, %v348
    %v351 = vand.u32 2147483647, %v31
    %vm352 = vcmp.le.f32.partialorder %v351, 0.7853982
    %vm353 = vcmp.lt.s32.totalorder %v31, 0
    %v354 = vand.u32 %v31, 2139095040
    %v355 = vshrl.u32 %v354, 23
    %v356 = vsub.s32 %v355, 127
    %v357 = vand.u32 2147483647, %v31
    %v358 = vand.u32 %v357, 8388607
    %v359 = vor.u32 %v358, 8388608
    %v360 = vsub.s32 0, %v359
    %v361 = vadd.s32 %v356, 1
    %vm362 = vcmp.gt.s32.totalorder %v361, 0
    %v363 = vsel %vm362, %v361, 0
    %v364 = vshrl.u32 %v363, 5
    %v365 = vand.u32 %v363, 31
    %v366 = vsub.s32 32, %v365
    %v367 = vshrl.u32 683565275, %v366
    %v368 = vshll.u32 683565275, %v365
    %v369 = vshrl.u32 2475754826, %v366
    %v370 = vor.u32 %v368, %v369
    %v371 = vshll.u32 2475754826, %v365
    %v372 = vshrl.u32 2131351028, %v366
    %v373 = vor.u32 %v371, %v372
    %v374 = vshll.u32 2131351028, %v365
    %v375 = vshrl.u32 2102212464, %v366
    %v376 = vor.u32 %v374, %v375
    %v377 = vshll.u32 2102212464, %v365
    %v378 = vshrl.u32 920167782, %v366
    %v379 = vor.u32 %v377, %v378
    %v380 = vshll.u32 920167782, %v365
    %v381 = vshrl.u32 1326507024, %v366
    %v382 = vor.u32 %v380, %v381
    %vm383 = vcmp.lt.s32.totalorder %v364, 1
    %vm384 = vcmp.lt.s32.totalorder %v364, 2
    %vm385 = vcmp.lt.s32.totalorder %v364, 3
    %vm386 = vcmp.lt.s32.totalorder %v364, 4
    %v387 = vsel %vm383, %v367, %v370
    %v388 = vsel %vm386, %v376, 2102212464
    %v389 = vsel %vm385, %v373, %v388
    %v390 = vsel %vm384, %v387, %v389
    %v391 = vsel %vm383, %v370, %v373
    %v392 = vsel %vm386, %v379, 920167782
    %v393 = vsel %vm385, %v376, %v392
    %v394 = vsel %vm384, %v391, %v393
    %v395 = vsel %vm383, %v373, %v376
    %v396 = vsel %vm386, %v382, 1326507024
    %v397 = vsel %vm385, %v379, %v396
    %v398 = vsel %vm384, %v395, %v397
    %v399 = vshll.u32 %v359, 8
    %v400 = vmul.u32.u64.compose %v399, %v398
    %v401 = vextract.low.u32 %v400
    %v402 = vextract.high.u32 %v400
    %v403 = vmul.u32.u64.compose %v399, %v394
    %v404 = vextract.low.u32 %v403
    %v405 = vextract.high.u32 %v403
    %v406 = vmul.u32 %v399, %v390
    %v407 = vadd.s32 %v402, %v404
    %vm408 = vc.u32 %v402, %v404
    %v409 = vadd.s32 %v405, 1
    %v410 = vsel %vm408, %v409, %v405
    %v411 = vadd.s32 %v406, %v410
    %v412 = vadd.s32 %v411, 536870912
    %v413 = vshrl.u32 %v412, 30
    %v414 = vshll.u32 %v413, 30
    %v415 = vsub.s32 %v411, %v414
    %vm416 = vcmp.lt.s32.totalorder %v415, 0
    %v417 = vsub.s32 0, %v415
    %v418 = vsel %vm416, %v417, %v415
    %v419 = vclz %v418
    %v420 = vsub.s32 %v419, 2
    %vm421 = vcmp.gt.s32.totalorder 0, %v420
    %v422 = vsel %vm421, 0, %v420
    %v423 = vsub.s32 32, %v422
    %v424 = vshll.u32 %v415, %v422
    %v425 = vshrl.u32 %v407, %v423
    %v426 = vor.u32 %v424, %v425
    %v427 = vsub.s32 4294967266, %v422
    %v428 = vadd.s32 %v427, 127
    %v429 = vshll.u32 %v428, 23
    %v430 = vor.u32 4788187, %v429
    %v431 = vand.u32 2147483647, %v430
    %v433 = vcvt.s32.f32 %v426
    %v434 = vmul.f32 %v433, %v431
    %v435 = vxor.u32 %v434, 2147483648
    %v436 = vsel %vm353, %v435, %v434
    %v437 = vsub.s32 4, %v413
    %v438 = vsel %vm353, %v437, %v413
    %v439 = vsel %vm352, %v31, %v436
    %v440 = vsel %vm352, 0, %v438
    %v441 = vcosq.f32.pop %v439
    %v442 = vsinq.f32.pop %v439
    %vm443 = vweird.f32 %v31
    %v444 = vand.u32 %v440, 3
    %vm445 = vcmp.lt.s32.totalorder %v444, 2
    %vm446 = vcmp.eq.s32.totalorder %v444, 0
    %v447 = vxor.u32 %v442, 2147483648
    %v448 = vsel %vm446, %v441, %v447
    %vm449 = vcmp.eq.s32.totalorder %v444, 2
    %v450 = vxor.u32 %v441, 2147483648
    %v451 = vsel %vm449, %v450, %v442
    %v452 = vsel %vm445, %v448, %v451
    %v453 = vsel %vm443, nan, %v452
    %v454 = vand.u32 2147483647, %v32
    %vm455 = vcmp.le.f32.partialorder %v454, 0.7853982
    %vm456 = vcmp.lt.s32.totalorder %v32, 0
    %v457 = vand.u32 %v32, 2139095040
    %v458 = vshrl.u32 %v457, 23
    %v459 = vsub.s32 %v458, 127
    %v460 = vand.u32 2147483647, %v32
    %v461 = vand.u32 %v460, 8388607
    %v462 = vor.u32 %v461, 8388608
    %v463 = vsub.s32 0, %v462
    %v464 = vadd.s32 %v459, 1
    %vm465 = vcmp.gt.s32.totalorder %v464, 0
    %v466 = vsel %vm465, %v464, 0
    %v467 = vshrl.u32 %v466, 5
    %v468 = vand.u32 %v466, 31
    %v469 = vsub.s32 32, %v468
    %v470 = vshrl.u32 683565275, %v469
    %v471 = vshll.u32 683565275, %v468
    %v472 = vshrl.u32 2475754826, %v469
    %v473 = vor.u32 %v471, %v472
    %v474 = vshll.u32 2475754826, %v468
    %v475 = vshrl.u32 2131351028, %v469
    %v476 = vor.u32 %v474, %v475
    %v477 = vshll.u32 2131351028, %v468
    %v478 = vshrl.u32 2102212464, %v469
    %v479 = vor.u32 %v477, %v478
    %v480 = vshll.u32 2102212464, %v468
    %v481 = vshrl.u32 920167782, %v469
    %v482 = vor.u32 %v480, %v481
    %v483 = vshll.u32 920167782, %v468
    %v484 = vshrl.u32 1326507024, %v469
    %v485 = vor.u32 %v483, %v484
    %vm486 = vcmp.lt.s32.totalorder %v467, 1
    %vm487 = vcmp.lt.s32.totalorder %v467, 2
    %vm488 = vcmp.lt.s32.totalorder %v467, 3
    %vm489 = vcmp.lt.s32.totalorder %v467, 4
    %v490 = vsel %vm486, %v470, %v473
    %v491 = vsel %vm489, %v479, 2102212464
    %v492 = vsel %vm488, %v476, %v491
    %v493 = vsel %vm487, %v490, %v492
    %v494 = vsel %vm486, %v473, %v476
    %v495 = vsel %vm489, %v482, 920167782
    %v496 = vsel %vm488, %v479, %v495
    %v497 = vsel %vm487, %v494, %v496
    %v498 = vsel %vm486, %v476, %v479
    %v499 = vsel %vm489, %v485, 1326507024
    %v500 = vsel %vm488, %v482, %v499
    %v501 = vsel %vm487, %v498, %v500
    %v502 = vshll.u32 %v462, 8
    %v503 = vmul.u32.u64.compose %v502, %v501
    %v504 = vextract.low.u32 %v503
    %v505 = vextract.high.u32 %v503
    %v506 = vmul.u32.u64.compose %v502, %v497
    %v507 = vextract.low.u32 %v506
    %v508 = vextract.high.u32 %v506
    %v509 = vmul.u32 %v502, %v493
    %v510 = vadd.s32 %v505, %v507
    %vm511 = vc.u32 %v505, %v507
    %v512 = vadd.s32 %v508, 1
    %v513 = vsel %vm511, %v512, %v508
    %v514 = vadd.s32 %v509, %v513
    %v515 = vadd.s32 %v514, 536870912
    %v516 = vshrl.u32 %v515, 30
    %v517 = vshll.u32 %v516, 30
    %v518 = vsub.s32 %v514, %v517
    %vm519 = vcmp.lt.s32.totalorder %v518, 0
    %v520 = vsub.s32 0, %v518
    %v521 = vsel %vm519, %v520, %v518
    %v522 = vclz %v521
    %v523 = vsub.s32 %v522, 2
    %vm524 = vcmp.gt.s32.totalorder 0, %v523
    %v525 = vsel %vm524, 0, %v523
    %v526 = vsub.s32 32, %v525
    %v527 = vshll.u32 %v518, %v525
    %v528 = vshrl.u32 %v510, %v526
    %v529 = vor.u32 %v527, %v528
    %v530 = vsub.s32 4294967266, %v525
    %v531 = vadd.s32 %v530, 127
    %v532 = vshll.u32 %v531, 23
    %v533 = vor.u32 4788187, %v532
    %v534 = vand.u32 2147483647, %v533
    %v536 = vcvt.s32.f32 %v529
    %v537 = vmul.f32 %v536, %v534
    %v538 = vxor.u32 %v537, 2147483648
    %v539 = vsel %vm456, %v538, %v537
    %v540 = vsub.s32 4, %v516
    %v541 = vsel %vm456, %v540, %v516
    %v542 = vsel %vm455, %v32, %v539
    %v543 = vsel %vm455, 0, %v541
    %v544 = vcosq.f32.pop %v542
    %v545 = vsinq.f32.pop %v542
    %vm546 = vweird.f32 %v32
    %v547 = vand.u32 %v543, 3
    %vm548 = vcmp.lt.s32.totalorder %v547, 2
    %vm549 = vcmp.eq.s32.totalorder %v547, 0
    %v550 = vxor.u32 %v545, 2147483648
    %v551 = vsel %vm549, %v544, %v550
    %vm552 = vcmp.eq.s32.totalorder %v547, 2
    %v553 = vxor.u32 %v544, 2147483648
    %v554 = vsel %vm552, %v553, %v545
    %v555 = vsel %vm548, %v551, %v554
    %v556 = vsel %vm546, nan, %v555
    %v557 = vand.u32 2147483647, %v33
    %vm558 = vcmp.le.f32.partialorder %v557, 0.7853982
    %vm559 = vcmp.lt.s32.totalorder %v33, 0
    %v560 = vand.u32 %v33, 2139095040
    %v561 = vshrl.u32 %v560, 23
    %v562 = vsub.s32 %v561, 127
    %v563 = vand.u32 2147483647, %v33
    %v564 = vand.u32 %v563, 8388607
    %v565 = vor.u32 %v564, 8388608
    %v566 = vsub.s32 0, %v565
    %v567 = vadd.s32 %v562, 1
    %vm568 = vcmp.gt.s32.totalorder %v567, 0
    %v569 = vsel %vm568, %v567, 0
    %v570 = vshrl.u32 %v569, 5
    %v571 = vand.u32 %v569, 31
    %v572 = vsub.s32 32, %v571
    %v573 = vshrl.u32 683565275, %v572
    %v574 = vshll.u32 683565275, %v571
    %v575 = vshrl.u32 2475754826, %v572
    %v576 = vor.u32 %v574, %v575
    %v577 = vshll.u32 2475754826, %v571
    %v578 = vshrl.u32 2131351028, %v572
    %v579 = vor.u32 %v577, %v578
    %v580 = vshll.u32 2131351028, %v571
    %v581 = vshrl.u32 2102212464, %v572
    %v582 = vor.u32 %v580, %v581
    %v583 = vshll.u32 2102212464, %v571
    %v584 = vshrl.u32 920167782, %v572
    %v585 = vor.u32 %v583, %v584
    %v586 = vshll.u32 920167782, %v571
    %v587 = vshrl.u32 1326507024, %v572
    %v588 = vor.u32 %v586, %v587
    %vm589 = vcmp.lt.s32.totalorder %v570, 1
    %vm590 = vcmp.lt.s32.totalorder %v570, 2
    %vm591 = vcmp.lt.s32.totalorder %v570, 3
    %vm592 = vcmp.lt.s32.totalorder %v570, 4
    %v593 = vsel %vm589, %v573, %v576
    %v594 = vsel %vm592, %v582, 2102212464
    %v595 = vsel %vm591, %v579, %v594
    %v596 = vsel %vm590, %v593, %v595
    %v597 = vsel %vm589, %v576, %v579
    %v598 = vsel %vm592, %v585, 920167782
    %v599 = vsel %vm591, %v582, %v598
    %v600 = vsel %vm590, %v597, %v599
    %v601 = vsel %vm589, %v579, %v582
    %v602 = vsel %vm592, %v588, 1326507024
    %v603 = vsel %vm591, %v585, %v602
    %v604 = vsel %vm590, %v601, %v603
    %v605 = vshll.u32 %v565, 8
    %v606 = vmul.u32.u64.compose %v605, %v604
    %v607 = vextract.low.u32 %v606
    %v608 = vextract.high.u32 %v606
    %v609 = vmul.u32.u64.compose %v605, %v600
    %v610 = vextract.low.u32 %v609
    %v611 = vextract.high.u32 %v609
    %v612 = vmul.u32 %v605, %v596
    %v613 = vadd.s32 %v608, %v610
    %vm614 = vc.u32 %v608, %v610
    %v615 = vadd.s32 %v611, 1
    %v616 = vsel %vm614, %v615, %v611
    %v617 = vadd.s32 %v612, %v616
    %v618 = vadd.s32 %v617, 536870912
    %v619 = vshrl.u32 %v618, 30
    %v620 = vshll.u32 %v619, 30
    %v621 = vsub.s32 %v617, %v620
    %vm622 = vcmp.lt.s32.totalorder %v621, 0
    %v623 = vsub.s32 0, %v621
    %v624 = vsel %vm622, %v623, %v621
    %v625 = vclz %v624
    %v626 = vsub.s32 %v625, 2
    %vm627 = vcmp.gt.s32.totalorder 0, %v626
    %v628 = vsel %vm627, 0, %v626
    %v629 = vsub.s32 32, %v628
    %v630 = vshll.u32 %v621, %v628
    %v631 = vshrl.u32 %v613, %v629
    %v632 = vor.u32 %v630, %v631
    %v633 = vsub.s32 4294967266, %v628
    %v634 = vadd.s32 %v633, 127
    %v635 = vshll.u32 %v634, 23
    %v636 = vor.u32 4788187, %v635
    %v637 = vand.u32 2147483647, %v636
    %v639 = vcvt.s32.f32 %v632
    %v640 = vmul.f32 %v639, %v637
    %v641 = vxor.u32 %v640, 2147483648
    %v642 = vsel %vm559, %v641, %v640
    %v643 = vsub.s32 4, %v619
    %v644 = vsel %vm559, %v643, %v619
    %v645 = vsel %vm558, %v33, %v642
    %v646 = vsel %vm558, 0, %v644
    %v647 = vcosq.f32.pop %v645
    %v648 = vsinq.f32.pop %v645
    %vm649 = vweird.f32 %v33
    %v650 = vand.u32 %v646, 3
    %vm651 = vcmp.lt.s32.totalorder %v650, 2
    %vm652 = vcmp.eq.s32.totalorder %v650, 0
    %v653 = vxor.u32 %v648, 2147483648
    %v654 = vsel %vm652, %v647, %v653
    %vm655 = vcmp.eq.s32.totalorder %v650, 2
    %v656 = vxor.u32 %v647, 2147483648
    %v657 = vsel %vm655, %v656, %v648
    %v658 = vsel %vm651, %v654, %v657
    %v659 = vsel %vm649, nan, %v658
    %v660 = vpack.c.bf16 %v556, %v453
    %v661 = vpack.c.bf16 %v659, %v659
    %v662 = vpack.c.bf16 %v31, %v31
    %v663 = vld [vmem:[%s5] sm:$0xff]
    %v664 = vld [vmem:[%s5 + $0x8] sm:$0xff]
    %v665 = vld [vmem:[%s5 + $0x10] sm:$0xff]
    %v666 = vld [vmem:[%s5 + $0x18] sm:$0xff]
    %v667 = vld [vmem:[%s1] sm:$0xf]
    %v668 = vld [vmem:[%s1 + $0x4] sm:$0xf]
    %v669 = vld [vmem:[%s1 + $0x8] sm:$0xf]
    %v670 = vld [vmem:[%s1 + $0xc] sm:$0xf]
    %v671 = vld [vmem:[%s2] sm:$0xf]
    %v672 = vld [vmem:[%s2 + $0x4] sm:$0xf]
    %v673 = vld [vmem:[%s2 + $0x8] sm:$0xf]
    %v674 = vld [vmem:[%s2 + $0xc] sm:$0xf]
    %v679 = vunpack.c.l.b16 %v671
    %v680 = vunpack.c.l.b16 %v672
    %v681 = vunpack.c.l.b16 %v673
    %v682 = vunpack.c.l.b16 %v674
    %v683 = vpack.c.b16 %v680, %v679
    %v684 = vpack.c.b16 %v682, %v681
    %vm685 = vcmask 195584
    %v687 = vsel %vm685, %v683, 0
    %v690 = vsel %vm685, %v684, 0
    %vm692 = vcmask 1043456
    %v694 = vsel %vm692, %v661, 0
    %696 = vmatprep.subr.bf16.mxu0 0
    %697 = vmatpush1.bf16.msra.mxu0 0
    %698 = vmatprep.subr.bf16.mxu0 0
    %699 = vmatpush1.bf16.msra.mxu0 0
    %700 = vmatprep.subr.bf16.mxu0 0
    %701 = vmatpush1.bf16.msra.mxu0 0
    %702 = vmatprep.subr.bf16.mxu0 0
    %703 = vmatpush1.bf16.msra.mxu0 0
    %704 = vmatprep.subr.bf16.mxu0 0
    %705 = vmatpush1.bf16.msra.mxu0 0
    %706 = vmatprep.subr.bf16.mxu0 0
    %707 = vmatpush1.bf16.msra.mxu0 0
    %708 = vmatprep.subr.bf16.mxu0 0
    %709 = vmatpush1.bf16.msra.mxu0 %v694
    %710 = vmatprep.subr.bf16.mxu0 0
    %711 = vmatpush1.bf16.msra.mxu0 %v660
    %712 = vmatprep.subr.bf16.mxu0 0
    %713 = vmatpush2.bf16.msra.mxu0 0
    %714 = vmatprep.subr.bf16.mxu0 0
    %715 = vmatpush2.bf16.msra.mxu0 0
    %716 = vmatprep.subr.bf16.mxu0 0
    %717 = vmatpush2.bf16.msra.mxu0 0
    %718 = vmatprep.subr.bf16.mxu0 0
    %719 = vmatpush2.bf16.msra.mxu0 0
    %720 = vmatprep.subr.bf16.mxu0 0
    %721 = vmatpush2.bf16.msra.mxu0 0
    %722 = vmatprep.subr.bf16.mxu0 0
    %723 = vmatpush2.bf16.msra.mxu0 0
    %724 = vmatprep.subr.bf16.mxu0 0
    %725 = vmatpush2.bf16.msra.mxu0 0
    %726 = vmatprep.subr.bf16.mxu0 0
    %727 = vmatpush2.bf16.msra.mxu0 0
    %728 = vmatprep.mubr.bf16.mxu0 0
    %729 = vmatmul.mubr.bf16.gmra.mxu0 %v687
    %v730 = vpop.f32.mrf.mxu0
    %v731 = vadd.f32 0.0, %v730
    %v732 = vpop.f32.mrf.mxu0
    %v733 = vpop.f32.mrf.mxu0
    %v734 = vadd.f32 0.0, %v733
    %v735 = vpop.f32.mrf.mxu0
    %736 = vmatprep.mubr.bf16.mxu0 0
    %737 = vmatmul.mubr.bf16.gmra.mxu0 %v690
    %v738 = vpop.f32.mrf.mxu0
    %v739 = vadd.f32 0.0, %v738
    %v740 = vpop.f32.mrf.mxu0
    %v741 = vpop.f32.mrf.mxu0
    %v742 = vadd.f32 0.0, %v741
    %v743 = vpop.f32.mrf.mxu0
    %744 = vdwg.mxu0
    %v749 = vunpack.c.l.b16 %v667
    %v750 = vunpack.c.l.b16 %v668
    %v751 = vunpack.c.l.b16 %v669
    %v752 = vunpack.c.l.b16 %v670
    %v753 = vpack.c.b16 %v750, %v749
    %v754 = vpack.c.b16 %v752, %v751
    %v756 = vsel %vm685, %v753, 0
    %v759 = vsel %vm685, %v754, 0
    %v762 = vsel %vm692, %v350, 0
    %764 = vmatprep.subr.bf16.mxu0 0
    %765 = vmatpush1.bf16.msra.mxu0 0
    %766 = vmatprep.subr.bf16.mxu0 0
    %767 = vmatpush1.bf16.msra.mxu0 0
    %768 = vmatprep.subr.bf16.mxu0 0
    %769 = vmatpush1.bf16.msra.mxu0 0
    %770 = vmatprep.subr.bf16.mxu0 0
    %771 = vmatpush1.bf16.msra.mxu0 0
    %772 = vmatprep.subr.bf16.mxu0 0
    %773 = vmatpush1.bf16.msra.mxu0 0
    %774 = vmatprep.subr.bf16.mxu0 0
    %775 = vmatpush1.bf16.msra.mxu0 0
    %776 = vmatprep.subr.bf16.mxu0 0
    %777 = vmatpush1.bf16.msra.mxu0 %v762
    %778 = vmatprep.subr.bf16.mxu0 0
    %779 = vmatpush1.bf16.msra.mxu0 %v349
    %780 = vmatprep.subr.bf16.mxu0 0
    %781 = vmatpush2.bf16.msra.mxu0 0
    %782 = vmatprep.subr.bf16.mxu0 0
    %783 = vmatpush2.bf16.msra.mxu0 0
    %784 = vmatprep.subr.bf16.mxu0 0
    %785 = vmatpush2.bf16.msra.mxu0 0
    %786 = vmatprep.subr.bf16.mxu0 0
    %787 = vmatpush2.bf16.msra.mxu0 0
    %788 = vmatprep.subr.bf16.mxu0 0
    %789 = vmatpush2.bf16.msra.mxu0 0
    %790 = vmatprep.subr.bf16.mxu0 0
    %791 = vmatpush2.bf16.msra.mxu0 0
    %792 = vmatprep.subr.bf16.mxu0 0
    %793 = vmatpush2.bf16.msra.mxu0 0
    %794 = vmatprep.subr.bf16.mxu0 0
    %795 = vmatpush2.bf16.msra.mxu0 0
    %796 = vmatprep.mubr.bf16.mxu0 0
    %797 = vmatmul.mubr.bf16.gmra.mxu0 %v756
    %v798 = vpop.f32.mrf.mxu0
    %v799 = vadd.f32 %v731, %v798
    %v800 = vpop.f32.mrf.mxu0
    %v801 = vpop.f32.mrf.mxu0
    %v802 = vadd.f32 %v734, %v801
    %v803 = vpop.f32.mrf.mxu0
    %804 = vmatprep.mubr.bf16.mxu0 0
    %805 = vmatmul.mubr.bf16.gmra.mxu0 %v759
    %v806 = vpop.f32.mrf.mxu0
    %v807 = vadd.f32 %v739, %v806
    %v808 = vpop.f32.mrf.mxu0
    %v809 = vpop.f32.mrf.mxu0
    %v810 = vadd.f32 %v742, %v809
    %v811 = vpop.f32.mrf.mxu0
    %812 = vdwg.mxu0
    %v813 = vld [vmem:[%s3] sm:$0xf]
    %v814 = vld [vmem:[%s3 + $0x4] sm:$0xf]
    %v815 = vld [vmem:[%s3 + $0x8] sm:$0xf]
    %v816 = vld [vmem:[%s3 + $0xc] sm:$0xf]
    %v821 = vunpack.c.l.b16 %v813
    %v822 = vunpack.c.l.b16 %v814
    %v823 = vunpack.c.l.b16 %v815
    %v824 = vunpack.c.l.b16 %v816
    %v825 = vpack.c.b16 %v822, %v821
    %v826 = vpack.c.b16 %v824, %v823
    %vm827 = vcmask 64512
    %v829 = vsel %vm827, %v825, 0
    %v832 = vsel %vm827, %v826, 0
    %v835 = vsel %vm692, %v662, 0
    %837 = vmatprep.subr.bf16.mxu0 0
    %838 = vmatpush1.bf16.msra.mxu0 0
    %839 = vmatprep.subr.bf16.mxu0 0
    %840 = vmatpush1.bf16.msra.mxu0 0
    %841 = vmatprep.subr.bf16.mxu0 0
    %842 = vmatpush1.bf16.msra.mxu0 0
    %843 = vmatprep.subr.bf16.mxu0 0
    %844 = vmatpush1.bf16.msra.mxu0 0
    %845 = vmatprep.subr.bf16.mxu0 0
    %846 = vmatpush1.bf16.msra.mxu0 0
    %847 = vmatprep.subr.bf16.mxu0 0
    %848 = vmatpush1.bf16.msra.mxu0 0
    %849 = vmatprep.subr.bf16.mxu0 0
    %850 = vmatpush1.bf16.msra.mxu0 0
    %851 = vmatprep.subr.bf16.mxu0 0
    %852 = vmatpush1.bf16.msra.mxu0 %v835
    %853 = vmatprep.subr.bf16.mxu0 0
    %854 = vmatpush2.bf16.msra.mxu0 0
    %855 = vmatprep.subr.bf16.mxu0 0
    %856 = vmatpush2.bf16.msra.mxu0 0
    %857 = vmatprep.subr.bf16.mxu0 0
    %858 = vmatpush2.bf16.msra.mxu0 0
    %859 = vmatprep.subr.bf16.mxu0 0
    %860 = vmatpush2.bf16.msra.mxu0 0
    %861 = vmatprep.subr.bf16.mxu0 0
    %862 = vmatpush2.bf16.msra.mxu0 0
    %863 = vmatprep.subr.bf16.mxu0 0
    %864 = vmatpush2.bf16.msra.mxu0 0
    %865 = vmatprep.subr.bf16.mxu0 0
    %866 = vmatpush2.bf16.msra.mxu0 0
    %867 = vmatprep.subr.bf16.mxu0 0
    %868 = vmatpush2.bf16.msra.mxu0 0
    %869 = vmatprep.mubr.bf16.mxu0 0
    %870 = vmatmul.mubr.bf16.gmra.mxu0 %v829
    %v871 = vpop.f32.mrf.mxu0
    %v872 = vadd.f32 0.0, %v871
    %v873 = vpop.f32.mrf.mxu0
    %v874 = vpop.f32.mrf.mxu0
    %v875 = vadd.f32 0.0, %v874
    %v876 = vpop.f32.mrf.mxu0
    %877 = vmatprep.mubr.bf16.mxu0 0
    %878 = vmatmul.mubr.bf16.gmra.mxu0 %v832
    %v879 = vpop.f32.mrf.mxu0
    %v880 = vadd.f32 0.0, %v879
    %v881 = vpop.f32.mrf.mxu0
    %v882 = vpop.f32.mrf.mxu0
    %v883 = vadd.f32 0.0, %v882
    %v884 = vpop.f32.mrf.mxu0
    %885 = vdwg.mxu0
    %v886 = vadd.f32 %v799, %v872
    %v887 = vadd.f32 %v802, %v875
    %v888 = vadd.f32 %v807, %v880
    %v889 = vadd.f32 %v810, %v883
    %891 = vset.pattern.permute.xlu0 0
    %892 = vperm.xlu0 %891, %v663
    %v893 = vpop.permute.xlu0 %892
    %896 = vset.pattern.permute.xlu0 0
    %897 = vperm.xlu0 %896, %v664
    %v898 = vpop.permute.xlu0 %897
    %901 = vset.pattern.permute.xlu0 0
    %902 = vperm.xlu0 %901, %v665
    %v903 = vpop.permute.xlu0 %902
    %906 = vset.pattern.permute.xlu0 0
    %907 = vperm.xlu0 %906, %v666
    %v908 = vpop.permute.xlu0 %907
    %v910 = vadd.f32 %v886, %v893
    %v911 = vadd.f32 %v887, %v898
    %v912 = vadd.f32 %v888, %v903
    %v913 = vadd.f32 %v889, %v908
    %v914 = vmax.f32 %v910, 0.0
    %v915 = vmax.f32 %v911, 0.0
    %v916 = vmax.f32 %v912, 0.0
    %v917 = vmax.f32 %v913, 0.0
    %v918 = vpack.c.bf16 %v915, %v914
    %v919 = vpack.c.bf16 %v917, %v916
    %v920 = vld [vmem:[%s4] sm:$0xf]
    %v921 = vld [vmem:[%s4 + $0x4] sm:$0xf]
    %v922 = vld [vmem:[%s4 + $0x8] sm:$0xf]
    %v923 = vld [vmem:[%s4 + $0xc] sm:$0xf]
    %924 = vset.pattern.permute.xlu0 1
    %925 = vperm.xlu0 %924, %v663
    %v926 = vpop.permute.xlu0 %925
    %928 = vset.pattern.permute.xlu0 1
    %929 = vperm.xlu0 %928, %v664
    %v930 = vpop.permute.xlu0 %929
    %932 = vset.pattern.permute.xlu0 1
    %933 = vperm.xlu0 %932, %v665
    %v934 = vpop.permute.xlu0 %933
    %936 = vset.pattern.permute.xlu0 1
    %937 = vperm.xlu0 %936, %v666
    %v938 = vpop.permute.xlu0 %937
    %v944 = vunpack.c.l.b16 %v920
    %v945 = vunpack.c.l.b16 %v921
    %v946 = vunpack.c.l.b16 %v922
    %v947 = vunpack.c.l.b16 %v923
    %v948 = vpack.c.b16 %v945, %v944
    %v949 = vpack.c.b16 %v947, %v946
    %vm950 = vcmask 261120
    %v952 = vsel %vm950, %v948, 0
    %v955 = vsel %vm950, %v949, 0
    %957 = vmatprep.subr.bf16.mxu0 0
    %958 = vmatpush1.bf16.msra.mxu0 0
    %959 = vmatprep.subr.bf16.mxu0 0
    %960 = vmatpush1.bf16.msra.mxu0 0
    %961 = vmatprep.subr.bf16.mxu0 0
    %962 = vmatpush1.bf16.msra.mxu0 0
    %963 = vmatprep.subr.bf16.mxu0 0
    %964 = vmatpush1.bf16.msra.mxu0 0
    %965 = vmatprep.subr.bf16.mxu0 0
    %966 = vmatpush1.bf16.msra.mxu0 0
    %967 = vmatprep.subr.bf16.mxu0 0
    %968 = vmatpush1.bf16.msra.mxu0 0
    %969 = vmatprep.subr.bf16.mxu0 0
    %970 = vmatpush1.bf16.msra.mxu0 %v919
    %971 = vmatprep.subr.bf16.mxu0 0
    %972 = vmatpush1.bf16.msra.mxu0 %v918
    %973 = vmatprep.subr.bf16.mxu0 0
    %974 = vmatpush2.bf16.msra.mxu0 0
    %975 = vmatprep.subr.bf16.mxu0 0
    %976 = vmatpush2.bf16.msra.mxu0 0
    %977 = vmatprep.subr.bf16.mxu0 0
    %978 = vmatpush2.bf16.msra.mxu0 0
    %979 = vmatprep.subr.bf16.mxu0 0
    %980 = vmatpush2.bf16.msra.mxu0 0
    %981 = vmatprep.subr.bf16.mxu0 0
    %982 = vmatpush2.bf16.msra.mxu0 0
    %983 = vmatprep.subr.bf16.mxu0 0
    %984 = vmatpush2.bf16.msra.mxu0 0
    %985 = vmatprep.subr.bf16.mxu0 0
    %986 = vmatpush2.bf16.msra.mxu0 0
    %987 = vmatprep.subr.bf16.mxu0 0
    %988 = vmatpush2.bf16.msra.mxu0 0
    %989 = vmatprep.mubr.bf16.mxu0 0
    %990 = vmatmul.mubr.bf16.gmra.mxu0 %v952
    %v991 = vpop.f32.mrf.mxu0
    %v992 = vadd.f32 %v926, %v991
    %v993 = vpop.f32.mrf.mxu0
    %v994 = vpop.f32.mrf.mxu0
    %v995 = vadd.f32 %v930, %v994
    %v996 = vpop.f32.mrf.mxu0
    %997 = vmatprep.mubr.bf16.mxu0 0
    %998 = vmatmul.mubr.bf16.gmra.mxu0 %v955
    %v999 = vpop.f32.mrf.mxu0
    %v1000 = vadd.f32 %v934, %v999
    %v1001 = vpop.f32.mrf.mxu0
    %v1002 = vpop.f32.mrf.mxu0
    %v1003 = vadd.f32 %v938, %v1002
    %v1004 = vpop.f32.mrf.mxu0
    %1005 = vdwg.mxu0
    %v1006 = vmax.f32 %v992, 0.0
    %v1007 = vmax.f32 %v995, 0.0
    %v1008 = vmax.f32 %v1000, 0.0
    %v1009 = vmax.f32 %v1003, 0.0
    %v1010 = vpack.c.bf16 %v1007, %v1006
    %v1011 = vpack.c.bf16 %v1009, %v1008
    %s1012 = scalar_lea.vmem %s4, 16
    %v1013 = vld [vmem:[%s1012] sm:$0xf]
    %v1014 = vld [vmem:[%s1012 + $0x4] sm:$0xf]
    %v1015 = vld [vmem:[%s1012 + $0x8] sm:$0xf]
    %v1016 = vld [vmem:[%s1012 + $0xc] sm:$0xf]
    %1017 = vset.pattern.permute.xlu0 2
    %1018 = vperm.xlu0 %1017, %v663
    %v1019 = vpop.permute.xlu0 %1018
    %1021 = vset.pattern.permute.xlu0 2
    %1022 = vperm.xlu0 %1021, %v664
    %v1023 = vpop.permute.xlu0 %1022
    %1025 = vset.pattern.permute.xlu0 2
    %1026 = vperm.xlu0 %1025, %v665
    %v1027 = vpop.permute.xlu0 %1026
    %1029 = vset.pattern.permute.xlu0 2
    %1030 = vperm.xlu0 %1029, %v666
    %v1031 = vpop.permute.xlu0 %1030
    %v1037 = vunpack.c.l.b16 %v1013
    %v1038 = vunpack.c.l.b16 %v1014
    %v1039 = vunpack.c.l.b16 %v1015
    %v1040 = vunpack.c.l.b16 %v1016
    %v1041 = vpack.c.b16 %v1038, %v1037
    %v1042 = vpack.c.b16 %v1040, %v1039
    %v1044 = vsel %vm950, %v1041, 0
    %v1047 = vsel %vm950, %v1042, 0
    %1049 = vmatprep.subr.bf16.mxu0 0
    %1050 = vmatpush1.bf16.msra.mxu0 0
    %1051 = vmatprep.subr.bf16.mxu0 0
    %1052 = vmatpush1.bf16.msra.mxu0 0
    %1053 = vmatprep.subr.bf16.mxu0 0
    %1054 = vmatpush1.bf16.msra.mxu0 0
    %1055 = vmatprep.subr.bf16.mxu0 0
    %1056 = vmatpush1.bf16.msra.mxu0 0
    %1057 = vmatprep.subr.bf16.mxu0 0
    %1058 = vmatpush1.bf16.msra.mxu0 0
    %1059 = vmatprep.subr.bf16.mxu0 0
    %1060 = vmatpush1.bf16.msra.mxu0 0
    %1061 = vmatprep.subr.bf16.mxu0 0
    %1062 = vmatpush1.bf16.msra.mxu0 %v1011
    %1063 = vmatprep.subr.bf16.mxu0 0
    %1064 = vmatpush1.bf16.msra.mxu0 %v1010
    %1065 = vmatprep.subr.bf16.mxu0 0
    %1066 = vmatpush2.bf16.msra.mxu0 0
    %1067 = vmatprep.subr.bf16.mxu0 0
    %1068 = vmatpush2.bf16.msra.mxu0 0
    %1069 = vmatprep.subr.bf16.mxu0 0
    %1070 = vmatpush2.bf16.msra.mxu0 0
    %1071 = vmatprep.subr.bf16.mxu0 0
    %1072 = vmatpush2.bf16.msra.mxu0 0
    %1073 = vmatprep.subr.bf16.mxu0 0
    %1074 = vmatpush2.bf16.msra.mxu0 0
    %1075 = vmatprep.subr.bf16.mxu0 0
    %1076 = vmatpush2.bf16.msra.mxu0 0
    %1077 = vmatprep.subr.bf16.mxu0 0
    %1078 = vmatpush2.bf16.msra.mxu0 0
    %1079 = vmatprep.subr.bf16.mxu0 0
    %1080 = vmatpush2.bf16.msra.mxu0 0
    %1081 = vmatprep.mubr.bf16.mxu0 0
    %1082 = vmatmul.mubr.bf16.gmra.mxu0 %v1044
    %v1083 = vpop.f32.mrf.mxu0
    %v1084 = vadd.f32 %v1019, %v1083
    %v1085 = vpop.f32.mrf.mxu0
    %v1086 = vpop.f32.mrf.mxu0
    %v1087 = vadd.f32 %v1023, %v1086
    %v1088 = vpop.f32.mrf.mxu0
    %1089 = vmatprep.mubr.bf16.mxu0 0
    %1090 = vmatmul.mubr.bf16.gmra.mxu0 %v1047
    %v1091 = vpop.f32.mrf.mxu0
    %v1092 = vadd.f32 %v1027, %v1091
    %v1093 = vpop.f32.mrf.mxu0
    %v1094 = vpop.f32.mrf.mxu0
    %v1095 = vadd.f32 %v1031, %v1094
    %v1096 = vpop.f32.mrf.mxu0
    %1097 = vdwg.mxu0
    %v1098 = vmax.f32 %v1084, 0.0
    %v1099 = vmax.f32 %v1087, 0.0
    %v1100 = vmax.f32 %v1092, 0.0
    %v1101 = vmax.f32 %v1095, 0.0
    %v1102 = vpack.c.bf16 %v1099, %v1098
    %v1103 = vpack.c.bf16 %v1101, %v1100
    %s1104 = scalar_lea.vmem %s4, 32
    %v1105 = vld [vmem:[%s1104] sm:$0xf]
    %v1106 = vld [vmem:[%s1104 + $0x4] sm:$0xf]
    %v1107 = vld [vmem:[%s1104 + $0x8] sm:$0xf]
    %v1108 = vld [vmem:[%s1104 + $0xc] sm:$0xf]
    %1109 = vset.pattern.permute.xlu0 3
    %1110 = vperm.xlu0 %1109, %v663
    %v1111 = vpop.permute.xlu0 %1110
    %1113 = vset.pattern.permute.xlu0 3
    %1114 = vperm.xlu0 %1113, %v664
    %v1115 = vpop.permute.xlu0 %1114
    %1117 = vset.pattern.permute.xlu0 3
    %1118 = vperm.xlu0 %1117, %v665
    %v1119 = vpop.permute.xlu0 %1118
    %1121 = vset.pattern.permute.xlu0 3
    %1122 = vperm.xlu0 %1121, %v666
    %v1123 = vpop.permute.xlu0 %1122
    %v1129 = vunpack.c.l.b16 %v1105
    %v1130 = vunpack.c.l.b16 %v1106
    %v1131 = vunpack.c.l.b16 %v1107
    %v1132 = vunpack.c.l.b16 %v1108
    %v1133 = vpack.c.b16 %v1130, %v1129
    %v1134 = vpack.c.b16 %v1132, %v1131
    %v1136 = vsel %vm950, %v1133, 0
    %v1139 = vsel %vm950, %v1134, 0
    %1141 = vmatprep.subr.bf16.mxu0 0
    %1142 = vmatpush1.bf16.msra.mxu0 0
    %1143 = vmatprep.subr.bf16.mxu0 0
    %1144 = vmatpush1.bf16.msra.mxu0 0
    %1145 = vmatprep.subr.bf16.mxu0 0
    %1146 = vmatpush1.bf16.msra.mxu0 0
    %1147 = vmatprep.subr.bf16.mxu0 0
    %1148 = vmatpush1.bf16.msra.mxu0 0
    %1149 = vmatprep.subr.bf16.mxu0 0
    %1150 = vmatpush1.bf16.msra.mxu0 0
    %1151 = vmatprep.subr.bf16.mxu0 0
    %1152 = vmatpush1.bf16.msra.mxu0 0
    %1153 = vmatprep.subr.bf16.mxu0 0
    %1154 = vmatpush1.bf16.msra.mxu0 %v1103
    %1155 = vmatprep.subr.bf16.mxu0 0
    %1156 = vmatpush1.bf16.msra.mxu0 %v1102
    %1157 = vmatprep.subr.bf16.mxu0 0
    %1158 = vmatpush2.bf16.msra.mxu0 0
    %1159 = vmatprep.subr.bf16.mxu0 0
    %1160 = vmatpush2.bf16.msra.mxu0 0
    %1161 = vmatprep.subr.bf16.mxu0 0
    %1162 = vmatpush2.bf16.msra.mxu0 0
    %1163 = vmatprep.subr.bf16.mxu0 0
    %1164 = vmatpush2.bf16.msra.mxu0 0
    %1165 = vmatprep.subr.bf16.mxu0 0
    %1166 = vmatpush2.bf16.msra.mxu0 0
    %1167 = vmatprep.subr.bf16.mxu0 0
    %1168 = vmatpush2.bf16.msra.mxu0 0
    %1169 = vmatprep.subr.bf16.mxu0 0
    %1170 = vmatpush2.bf16.msra.mxu0 0
    %1171 = vmatprep.subr.bf16.mxu0 0
    %1172 = vmatpush2.bf16.msra.mxu0 0
    %1173 = vmatprep.mubr.bf16.mxu0 0
    %1174 = vmatmul.mubr.bf16.gmra.mxu0 %v1136
    %v1175 = vpop.f32.mrf.mxu0
    %v1176 = vadd.f32 %v1111, %v1175
    %v1177 = vpop.f32.mrf.mxu0
    %v1178 = vpop.f32.mrf.mxu0
    %v1179 = vadd.f32 %v1115, %v1178
    %v1180 = vpop.f32.mrf.mxu0
    %1181 = vmatprep.mubr.bf16.mxu0 0
    %1182 = vmatmul.mubr.bf16.gmra.mxu0 %v1139
    %v1183 = vpop.f32.mrf.mxu0
    %v1184 = vadd.f32 %v1119, %v1183
    %v1185 = vpop.f32.mrf.mxu0
    %v1186 = vpop.f32.mrf.mxu0
    %v1187 = vadd.f32 %v1123, %v1186
    %v1188 = vpop.f32.mrf.mxu0
    %1189 = vdwg.mxu0
    %v1190 = vmax.f32 %v1176, 0.0
    %v1191 = vmax.f32 %v1179, 0.0
    %v1192 = vmax.f32 %v1184, 0.0
    %v1193 = vmax.f32 %v1187, 0.0
    %v1194 = vpack.c.bf16 %v1191, %v1190
    %v1195 = vpack.c.bf16 %v1193, %v1192
    %s1196 = scalar_lea.vmem %s4, 48
    %v1197 = vld [vmem:[%s1196] sm:$0xf]
    %v1198 = vld [vmem:[%s1196 + $0x4] sm:$0xf]
    %v1199 = vld [vmem:[%s1196 + $0x8] sm:$0xf]
    %v1200 = vld [vmem:[%s1196 + $0xc] sm:$0xf]
    %s1201 = scalar_lea.vmem %s1, 16
    %v1202 = vld [vmem:[%s1201] sm:$0xf]
    %v1203 = vld [vmem:[%s1201 + $0x4] sm:$0xf]
    %v1204 = vld [vmem:[%s1201 + $0x8] sm:$0xf]
    %v1205 = vld [vmem:[%s1201 + $0xc] sm:$0xf]
    %s1206 = scalar_lea.vmem %s2, 16
    %v1207 = vld [vmem:[%s1206] sm:$0xf]
    %v1208 = vld [vmem:[%s1206 + $0x4] sm:$0xf]
    %v1209 = vld [vmem:[%s1206 + $0x8] sm:$0xf]
    %v1210 = vld [vmem:[%s1206 + $0xc] sm:$0xf]
    %v1215 = vunpack.c.l.b16 %v1207
    %v1216 = vunpack.c.l.b16 %v1208
    %v1217 = vunpack.c.l.b16 %v1209
    %v1218 = vunpack.c.l.b16 %v1210
    %v1219 = vpack.c.b16 %v1216, %v1215
    %v1220 = vpack.c.b16 %v1218, %v1217
    %v1222 = vsel %vm685, %v1219, 0
    %v1225 = vsel %vm685, %v1220, 0
    %1227 = vmatprep.subr.bf16.mxu0 0
    %1228 = vmatpush1.bf16.msra.mxu0 0
    %1229 = vmatprep.subr.bf16.mxu0 0
    %1230 = vmatpush1.bf16.msra.mxu0 0
    %1231 = vmatprep.subr.bf16.mxu0 0
    %1232 = vmatpush1.bf16.msra.mxu0 0
    %1233 = vmatprep.subr.bf16.mxu0 0
    %1234 = vmatpush1.bf16.msra.mxu0 0
    %1235 = vmatprep.subr.bf16.mxu0 0
    %1236 = vmatpush1.bf16.msra.mxu0 0
    %1237 = vmatprep.subr.bf16.mxu0 0
    %1238 = vmatpush1.bf16.msra.mxu0 0
    %1239 = vmatprep.subr.bf16.mxu0 0
    %1240 = vmatpush1.bf16.msra.mxu0 %v694
    %1241 = vmatprep.subr.bf16.mxu0 0
    %1242 = vmatpush1.bf16.msra.mxu0 %v660
    %1243 = vmatprep.subr.bf16.mxu0 0
    %1244 = vmatpush2.bf16.msra.mxu0 0
    %1245 = vmatprep.subr.bf16.mxu0 0
    %1246 = vmatpush2.bf16.msra.mxu0 0
    %1247 = vmatprep.subr.bf16.mxu0 0
    %1248 = vmatpush2.bf16.msra.mxu0 0
    %1249 = vmatprep.subr.bf16.mxu0 0
    %1250 = vmatpush2.bf16.msra.mxu0 0
    %1251 = vmatprep.subr.bf16.mxu0 0
    %1252 = vmatpush2.bf16.msra.mxu0 0
    %1253 = vmatprep.subr.bf16.mxu0 0
    %1254 = vmatpush2.bf16.msra.mxu0 0
    %1255 = vmatprep.subr.bf16.mxu0 0
    %1256 = vmatpush2.bf16.msra.mxu0 0
    %1257 = vmatprep.subr.bf16.mxu0 0
    %1258 = vmatpush2.bf16.msra.mxu0 0
    %1259 = vmatprep.mubr.bf16.mxu0 0
    %1260 = vmatmul.mubr.bf16.gmra.mxu0 %v1222
    %v1261 = vpop.f32.mrf.mxu0
    %v1262 = vadd.f32 0.0, %v1261
    %v1263 = vpop.f32.mrf.mxu0
    %v1264 = vpop.f32.mrf.mxu0
    %v1265 = vadd.f32 0.0, %v1264
    %v1266 = vpop.f32.mrf.mxu0
    %1267 = vmatprep.mubr.bf16.mxu0 0
    %1268 = vmatmul.mubr.bf16.gmra.mxu0 %v1225
    %v1269 = vpop.f32.mrf.mxu0
    %v1270 = vadd.f32 0.0, %v1269
    %v1271 = vpop.f32.mrf.mxu0
    %v1272 = vpop.f32.mrf.mxu0
    %v1273 = vadd.f32 0.0, %v1272
    %v1274 = vpop.f32.mrf.mxu0
    %1275 = vdwg.mxu0
    %v1280 = vunpack.c.l.b16 %v1202
    %v1281 = vunpack.c.l.b16 %v1203
    %v1282 = vunpack.c.l.b16 %v1204
    %v1283 = vunpack.c.l.b16 %v1205
    %v1284 = vpack.c.b16 %v1281, %v1280
    %v1285 = vpack.c.b16 %v1283, %v1282
    %v1287 = vsel %vm685, %v1284, 0
    %v1290 = vsel %vm685, %v1285, 0
    %1292 = vmatprep.subr.bf16.mxu0 0
    %1293 = vmatpush1.bf16.msra.mxu0 0
    %1294 = vmatprep.subr.bf16.mxu0 0
    %1295 = vmatpush1.bf16.msra.mxu0 0
    %1296 = vmatprep.subr.bf16.mxu0 0
    %1297 = vmatpush1.bf16.msra.mxu0 0
    %1298 = vmatprep.subr.bf16.mxu0 0
    %1299 = vmatpush1.bf16.msra.mxu0 0
    %1300 = vmatprep.subr.bf16.mxu0 0
    %1301 = vmatpush1.bf16.msra.mxu0 0
    %1302 = vmatprep.subr.bf16.mxu0 0
    %1303 = vmatpush1.bf16.msra.mxu0 0
    %1304 = vmatprep.subr.bf16.mxu0 0
    %1305 = vmatpush1.bf16.msra.mxu0 %v762
    %1306 = vmatprep.subr.bf16.mxu0 0
    %1307 = vmatpush1.bf16.msra.mxu0 %v349
    %1308 = vmatprep.subr.bf16.mxu0 0
    %1309 = vmatpush2.bf16.msra.mxu0 0
    %1310 = vmatprep.subr.bf16.mxu0 0
    %1311 = vmatpush2.bf16.msra.mxu0 0
    %1312 = vmatprep.subr.bf16.mxu0 0
    %1313 = vmatpush2.bf16.msra.mxu0 0
    %1314 = vmatprep.subr.bf16.mxu0 0
    %1315 = vmatpush2.bf16.msra.mxu0 0
    %1316 = vmatprep.subr.bf16.mxu0 0
    %1317 = vmatpush2.bf16.msra.mxu0 0
    %1318 = vmatprep.subr.bf16.mxu0 0
    %1319 = vmatpush2.bf16.msra.mxu0 0
    %1320 = vmatprep.subr.bf16.mxu0 0
    %1321 = vmatpush2.bf16.msra.mxu0 0
    %1322 = vmatprep.subr.bf16.mxu0 0
    %1323 = vmatpush2.bf16.msra.mxu0 0
    %1324 = vmatprep.mubr.bf16.mxu0 0
    %1325 = vmatmul.mubr.bf16.gmra.mxu0 %v1287
    %v1326 = vpop.f32.mrf.mxu0
    %v1327 = vadd.f32 %v1262, %v1326
    %v1328 = vpop.f32.mrf.mxu0
    %v1329 = vpop.f32.mrf.mxu0
    %v1330 = vadd.f32 %v1265, %v1329
    %v1331 = vpop.f32.mrf.mxu0
    %1332 = vmatprep.mubr.bf16.mxu0 0
    %1333 = vmatmul.mubr.bf16.gmra.mxu0 %v1290
    %v1334 = vpop.f32.mrf.mxu0
    %v1335 = vadd.f32 %v1270, %v1334
    %v1336 = vpop.f32.mrf.mxu0
    %v1337 = vpop.f32.mrf.mxu0
    %v1338 = vadd.f32 %v1273, %v1337
    %v1339 = vpop.f32.mrf.mxu0
    %1340 = vdwg.mxu0
    %s1341 = scalar_lea.vmem %s3, 16
    %v1342 = vld [vmem:[%s1341] sm:$0xf]
    %v1343 = vld [vmem:[%s1341 + $0x4] sm:$0xf]
    %v1344 = vld [vmem:[%s1341 + $0x8] sm:$0xf]
    %v1345 = vld [vmem:[%s1341 + $0xc] sm:$0xf]
    %v1350 = vunpack.c.l.b16 %v1342
    %v1351 = vunpack.c.l.b16 %v1343
    %v1352 = vunpack.c.l.b16 %v1344
    %v1353 = vunpack.c.l.b16 %v1345
    %v1354 = vpack.c.b16 %v1351, %v1350
    %v1355 = vpack.c.b16 %v1353, %v1352
    %v1357 = vsel %vm827, %v1354, 0
    %v1360 = vsel %vm827, %v1355, 0
    %1362 = vmatprep.subr.bf16.mxu0 0
    %1363 = vmatpush1.bf16.msra.mxu0 0
    %1364 = vmatprep.subr.bf16.mxu0 0
    %1365 = vmatpush1.bf16.msra.mxu0 0
    %1366 = vmatprep.subr.bf16.mxu0 0
    %1367 = vmatpush1.bf16.msra.mxu0 0
    %1368 = vmatprep.subr.bf16.mxu0 0
    %1369 = vmatpush1.bf16.msra.mxu0 0
    %1370 = vmatprep.subr.bf16.mxu0 0
    %1371 = vmatpush1.bf16.msra.mxu0 0
    %1372 = vmatprep.subr.bf16.mxu0 0
    %1373 = vmatpush1.bf16.msra.mxu0 0
    %1374 = vmatprep.subr.bf16.mxu0 0
    %1375 = vmatpush1.bf16.msra.mxu0 0
    %1376 = vmatprep.subr.bf16.mxu0 0
    %1377 = vmatpush1.bf16.msra.mxu0 %v835
    %1378 = vmatprep.subr.bf16.mxu0 0
    %1379 = vmatpush2.bf16.msra.mxu0 0
    %1380 = vmatprep.subr.bf16.mxu0 0
    %1381 = vmatpush2.bf16.msra.mxu0 0
    %1382 = vmatprep.subr.bf16.mxu0 0
    %1383 = vmatpush2.bf16.msra.mxu0 0
    %1384 = vmatprep.subr.bf16.mxu0 0
    %1385 = vmatpush2.bf16.msra.mxu0 0
    %1386 = vmatprep.subr.bf16.mxu0 0
    %1387 = vmatpush2.bf16.msra.mxu0 0
    %1388 = vmatprep.subr.bf16.mxu0 0
    %1389 = vmatpush2.bf16.msra.mxu0 0
    %1390 = vmatprep.subr.bf16.mxu0 0
    %1391 = vmatpush2.bf16.msra.mxu0 0
    %1392 = vmatprep.subr.bf16.mxu0 0
    %1393 = vmatpush2.bf16.msra.mxu0 0
    %1394 = vmatprep.mubr.bf16.mxu0 0
    %1395 = vmatmul.mubr.bf16.gmra.mxu0 %v1357
    %v1396 = vpop.f32.mrf.mxu0
    %v1397 = vadd.f32 0.0, %v1396
    %v1398 = vpop.f32.mrf.mxu0
    %v1399 = vpop.f32.mrf.mxu0
    %v1400 = vadd.f32 0.0, %v1399
    %v1401 = vpop.f32.mrf.mxu0
    %1402 = vmatprep.mubr.bf16.mxu0 0
    %1403 = vmatmul.mubr.bf16.gmra.mxu0 %v1360
    %v1404 = vpop.f32.mrf.mxu0
    %v1405 = vadd.f32 0.0, %v1404
    %v1406 = vpop.f32.mrf.mxu0
    %v1407 = vpop.f32.mrf.mxu0
    %v1408 = vadd.f32 0.0, %v1407
    %v1409 = vpop.f32.mrf.mxu0
    %1410 = vdwg.mxu0
    %v1411 = vadd.f32 %v1327, %v1397
    %v1412 = vadd.f32 %v1330, %v1400
    %v1413 = vadd.f32 %v1335, %v1405
    %v1414 = vadd.f32 %v1338, %v1408
    %v1419 = vunpack.c.l.b16 %v1197
    %v1420 = vunpack.c.l.b16 %v1198
    %v1421 = vunpack.c.l.b16 %v1199
    %v1422 = vunpack.c.l.b16 %v1200
    %v1423 = vpack.c.b16 %v1420, %v1419
    %v1424 = vpack.c.b16 %v1422, %v1421
    %v1426 = vsel %vm950, %v1423, 0
    %v1429 = vsel %vm950, %v1424, 0
    %1431 = vmatprep.subr.bf16.mxu0 0
    %1432 = vmatpush1.bf16.msra.mxu0 0
    %1433 = vmatprep.subr.bf16.mxu0 0
    %1434 = vmatpush1.bf16.msra.mxu0 0
    %1435 = vmatprep.subr.bf16.mxu0 0
    %1436 = vmatpush1.bf16.msra.mxu0 0
    %1437 = vmatprep.subr.bf16.mxu0 0
    %1438 = vmatpush1.bf16.msra.mxu0 0
    %1439 = vmatprep.subr.bf16.mxu0 0
    %1440 = vmatpush1.bf16.msra.mxu0 0
    %1441 = vmatprep.subr.bf16.mxu0 0
    %1442 = vmatpush1.bf16.msra.mxu0 0
    %1443 = vmatprep.subr.bf16.mxu0 0
    %1444 = vmatpush1.bf16.msra.mxu0 %v1195
    %1445 = vmatprep.subr.bf16.mxu0 0
    %1446 = vmatpush1.bf16.msra.mxu0 %v1194
    %1447 = vmatprep.subr.bf16.mxu0 0
    %1448 = vmatpush2.bf16.msra.mxu0 0
    %1449 = vmatprep.subr.bf16.mxu0 0
    %1450 = vmatpush2.bf16.msra.mxu0 0
    %1451 = vmatprep.subr.bf16.mxu0 0
    %1452 = vmatpush2.bf16.msra.mxu0 0
    %1453 = vmatprep.subr.bf16.mxu0 0
    %1454 = vmatpush2.bf16.msra.mxu0 0
    %1455 = vmatprep.subr.bf16.mxu0 0
    %1456 = vmatpush2.bf16.msra.mxu0 0
    %1457 = vmatprep.subr.bf16.mxu0 0
    %1458 = vmatpush2.bf16.msra.mxu0 0
    %1459 = vmatprep.subr.bf16.mxu0 0
    %1460 = vmatpush2.bf16.msra.mxu0 0
    %1461 = vmatprep.subr.bf16.mxu0 0
    %1462 = vmatpush2.bf16.msra.mxu0 0
    %1463 = vmatprep.mubr.bf16.mxu0 0
    %1464 = vmatmul.mubr.bf16.gmra.mxu0 %v1426
    %v1465 = vpop.f32.mrf.mxu0
    %v1466 = vadd.f32 %v1411, %v1465
    %v1467 = vpop.f32.mrf.mxu0
    %v1468 = vpop.f32.mrf.mxu0
    %v1469 = vadd.f32 %v1412, %v1468
    %v1470 = vpop.f32.mrf.mxu0
    %1471 = vmatprep.mubr.bf16.mxu0 0
    %1472 = vmatmul.mubr.bf16.gmra.mxu0 %v1429
    %v1473 = vpop.f32.mrf.mxu0
    %v1474 = vadd.f32 %v1413, %v1473
    %v1475 = vpop.f32.mrf.mxu0
    %v1476 = vpop.f32.mrf.mxu0
    %v1477 = vadd.f32 %v1414, %v1476
    %v1478 = vpop.f32.mrf.mxu0
    %1479 = vdwg.mxu0
    %1480 = vset.pattern.permute.xlu0 4
    %1481 = vperm.xlu0 %1480, %v663
    %v1482 = vpop.permute.xlu0 %1481
    %1484 = vset.pattern.permute.xlu0 4
    %1485 = vperm.xlu0 %1484, %v664
    %v1486 = vpop.permute.xlu0 %1485
    %1488 = vset.pattern.permute.xlu0 4
    %1489 = vperm.xlu0 %1488, %v665
    %v1490 = vpop.permute.xlu0 %1489
    %1492 = vset.pattern.permute.xlu0 4
    %1493 = vperm.xlu0 %1492, %v666
    %v1494 = vpop.permute.xlu0 %1493
    %v1496 = vadd.f32 %v1466, %v1482
    %v1497 = vadd.f32 %v1469, %v1486
    %v1498 = vadd.f32 %v1474, %v1490
    %v1499 = vadd.f32 %v1477, %v1494
    %v1500 = vmax.f32 %v1496, 0.0
    %v1501 = vmax.f32 %v1497, 0.0
    %v1502 = vmax.f32 %v1498, 0.0
    %v1503 = vmax.f32 %v1499, 0.0
    %v1504 = vpack.c.bf16 %v1501, %v1500
    %v1505 = vpack.c.bf16 %v1503, %v1502
    %s1506 = scalar_lea.vmem %s4, 64
    %v1507 = vld [vmem:[%s1506] sm:$0xf]
    %v1508 = vld [vmem:[%s1506 + $0x4] sm:$0xf]
    %v1509 = vld [vmem:[%s1506 + $0x8] sm:$0xf]
    %v1510 = vld [vmem:[%s1506 + $0xc] sm:$0xf]
    %1511 = vset.pattern.permute.xlu0 5
    %1512 = vperm.xlu0 %1511, %v663
    %v1513 = vpop.permute.xlu0 %1512
    %1515 = vset.pattern.permute.xlu0 5
    %1516 = vperm.xlu0 %1515, %v664
    %v1517 = vpop.permute.xlu0 %1516
    %1519 = vset.pattern.permute.xlu0 5
    %1520 = vperm.xlu0 %1519, %v665
    %v1521 = vpop.permute.xlu0 %1520
    %1523 = vset.pattern.permute.xlu0 5
    %1524 = vperm.xlu0 %1523, %v666
    %v1525 = vpop.permute.xlu0 %1524
    %v1531 = vunpack.c.l.b16 %v1507
    %v1532 = vunpack.c.l.b16 %v1508
    %v1533 = vunpack.c.l.b16 %v1509
    %v1534 = vunpack.c.l.b16 %v1510
    %v1535 = vpack.c.b16 %v1532, %v1531
    %v1536 = vpack.c.b16 %v1534, %v1533
    %v1538 = vsel %vm950, %v1535, 0
    %v1541 = vsel %vm950, %v1536, 0
    %1543 = vmatprep.subr.bf16.mxu0 0
    %1544 = vmatpush1.bf16.msra.mxu0 0
    %1545 = vmatprep.subr.bf16.mxu0 0
    %1546 = vmatpush1.bf16.msra.mxu0 0
    %1547 = vmatprep.subr.bf16.mxu0 0
    %1548 = vmatpush1.bf16.msra.mxu0 0
    %1549 = vmatprep.subr.bf16.mxu0 0
    %1550 = vmatpush1.bf16.msra.mxu0 0
    %1551 = vmatprep.subr.bf16.mxu0 0
    %1552 = vmatpush1.bf16.msra.mxu0 0
    %1553 = vmatprep.subr.bf16.mxu0 0
    %1554 = vmatpush1.bf16.msra.mxu0 0
    %1555 = vmatprep.subr.bf16.mxu0 0
    %1556 = vmatpush1.bf16.msra.mxu0 %v1505
    %1557 = vmatprep.subr.bf16.mxu0 0
    %1558 = vmatpush1.bf16.msra.mxu0 %v1504
    %1559 = vmatprep.subr.bf16.mxu0 0
    %1560 = vmatpush2.bf16.msra.mxu0 0
    %1561 = vmatprep.subr.bf16.mxu0 0
    %1562 = vmatpush2.bf16.msra.mxu0 0
    %1563 = vmatprep.subr.bf16.mxu0 0
    %1564 = vmatpush2.bf16.msra.mxu0 0
    %1565 = vmatprep.subr.bf16.mxu0 0
    %1566 = vmatpush2.bf16.msra.mxu0 0
    %1567 = vmatprep.subr.bf16.mxu0 0
    %1568 = vmatpush2.bf16.msra.mxu0 0
    %1569 = vmatprep.subr.bf16.mxu0 0
    %1570 = vmatpush2.bf16.msra.mxu0 0
    %1571 = vmatprep.subr.bf16.mxu0 0
    %1572 = vmatpush2.bf16.msra.mxu0 0
    %1573 = vmatprep.subr.bf16.mxu0 0
    %1574 = vmatpush2.bf16.msra.mxu0 0
    %1575 = vmatprep.mubr.bf16.mxu0 0
    %1576 = vmatmul.mubr.bf16.gmra.mxu0 %v1538
    %v1577 = vpop.f32.mrf.mxu0
    %v1578 = vadd.f32 %v1513, %v1577
    %v1579 = vpop.f32.mrf.mxu0
    %v1580 = vpop.f32.mrf.mxu0
    %v1581 = vadd.f32 %v1517, %v1580
    %v1582 = vpop.f32.mrf.mxu0
    %1583 = vmatprep.mubr.bf16.mxu0 0
    %1584 = vmatmul.mubr.bf16.gmra.mxu0 %v1541
    %v1585 = vpop.f32.mrf.mxu0
    %v1586 = vadd.f32 %v1521, %v1585
    %v1587 = vpop.f32.mrf.mxu0
    %v1588 = vpop.f32.mrf.mxu0
    %v1589 = vadd.f32 %v1525, %v1588
    %v1590 = vpop.f32.mrf.mxu0
    %1591 = vdwg.mxu0
    %v1592 = vpack.c.bf16 %v1581, %v1578
    %v1593 = vpack.c.bf16 %v1589, %v1586
    %v1594 = vld [vmem:[%s6] sm:$0xf]
    %v1595 = vld [vmem:[%s6 + $0x4] sm:$0xf]
    %v1596 = vld [vmem:[%s6 + $0x8] sm:$0xf]
    %v1600 = vunpack.c.l.b16 %v1594
    %v1601 = vunpack.c.l.b16 %v1595
    %v1602 = vunpack.c.l.b16 %v1596
    %v1603 = vpack.c.b16 %v1601, %v1600
    %v1604 = vpack.c.b16 %v1602, %v1602
    %v1606 = vsel %vm950, %v1603, 0
    %v1609 = vsel %vm950, %v1604, 0
    %1611 = vmatprep.subr.bf16.mxu0 0
    %1612 = vmatpush1.bf16.msra.mxu0 0
    %1613 = vmatprep.subr.bf16.mxu0 0
    %1614 = vmatpush1.bf16.msra.mxu0 0
    %1615 = vmatprep.subr.bf16.mxu0 0
    %1616 = vmatpush1.bf16.msra.mxu0 0
    %1617 = vmatprep.subr.bf16.mxu0 0
    %1618 = vmatpush1.bf16.msra.mxu0 0
    %1619 = vmatprep.subr.bf16.mxu0 0
    %1620 = vmatpush1.bf16.msra.mxu0 0
    %1621 = vmatprep.subr.bf16.mxu0 0
    %1622 = vmatpush1.bf16.msra.mxu0 0
    %1623 = vmatprep.subr.bf16.mxu0 0
    %1624 = vmatpush1.bf16.msra.mxu0 %v1593
    %1625 = vmatprep.subr.bf16.mxu0 0
    %1626 = vmatpush1.bf16.msra.mxu0 %v1592
    %1627 = vmatprep.subr.bf16.mxu0 0
    %1628 = vmatpush2.bf16.msra.mxu0 0
    %1629 = vmatprep.subr.bf16.mxu0 0
    %1630 = vmatpush2.bf16.msra.mxu0 0
    %1631 = vmatprep.subr.bf16.mxu0 0
    %1632 = vmatpush2.bf16.msra.mxu0 0
    %1633 = vmatprep.subr.bf16.mxu0 0
    %1634 = vmatpush2.bf16.msra.mxu0 0
    %1635 = vmatprep.subr.bf16.mxu0 0
    %1636 = vmatpush2.bf16.msra.mxu0 0
    %1637 = vmatprep.subr.bf16.mxu0 0
    %1638 = vmatpush2.bf16.msra.mxu0 0
    %1639 = vmatprep.subr.bf16.mxu0 0
    %1640 = vmatpush2.bf16.msra.mxu0 0
    %1641 = vmatprep.subr.bf16.mxu0 0
    %1642 = vmatpush2.bf16.msra.mxu0 0
    %1643 = vmatprep.mubr.bf16.mxu0 0
    %1644 = vmatmul.mubr.bf16.gmra.mxu0 %v1606
    %v1645 = vpop.f32.mrf.mxu0
    %v1646 = vadd.f32 %v34, %v1645
    %v1647 = vpop.f32.mrf.mxu0
    %v1648 = vpop.f32.mrf.mxu0
    %v1649 = vadd.f32 %v35, %v1648
    %v1650 = vpop.f32.mrf.mxu0
    %1651 = vmatprep.mubr.bf16.mxu0 0
    %1652 = vmatmul.mubr.bf16.gmra.mxu0 %v1609
    %v1653 = vpop.f32.mrf.mxu0
    %v1654 = vadd.f32 %v36, %v1653
    %v1655 = vpop.f32.mrf.mxu0
    %v1656 = vpop.f32.mrf.mxu0
    %v1657 = vpop.f32.mrf.mxu0
    %1658 = vdwg.mxu0
    %v1659 = vmax.f32 %v1654, 0.0
    %v1660 = vpack.c.bf16 %v1649, %v1646
    %v1661 = vld [vmem:[%s5] sm:$0xff]
    %v1662 = vld [vmem:[%s7] sm:$0xf]
    %1664 = vset.pattern.permute.xlu0 6
    %1665 = vperm.xlu0 %1664, %v1661
    %v1666 = vpop.permute.xlu0 %1665
    %vm1668 = vcmask 130048
    %v1670 = vsel %vm1668, %v1662, 0
    %1672 = vmatprep.subr.bf16.mxu0 0
    %1673 = vmatpush1.bf16.msra.mxu0 0
    %1674 = vmatprep.subr.bf16.mxu0 0
    %1675 = vmatpush1.bf16.msra.mxu0 0
    %1676 = vmatprep.subr.bf16.mxu0 0
    %1677 = vmatpush1.bf16.msra.mxu0 0
    %1678 = vmatprep.subr.bf16.mxu0 0
    %1679 = vmatpush1.bf16.msra.mxu0 0
    %1680 = vmatprep.subr.bf16.mxu0 0
    %1681 = vmatpush1.bf16.msra.mxu0 0
    %1682 = vmatprep.subr.bf16.mxu0 0
    %1683 = vmatpush1.bf16.msra.mxu0 0
    %1684 = vmatprep.subr.bf16.mxu0 0
    %1685 = vmatpush1.bf16.msra.mxu0 0
    %1686 = vmatprep.subr.bf16.mxu0 0
    %1687 = vmatpush1.bf16.msra.mxu0 %v1660
    %1688 = vmatprep.subr.bf16.mxu0 0
    %1689 = vmatpush2.bf16.msra.mxu0 0
    %1690 = vmatprep.subr.bf16.mxu0 0
    %1691 = vmatpush2.bf16.msra.mxu0 0
    %1692 = vmatprep.subr.bf16.mxu0 0
    %1693 = vmatpush2.bf16.msra.mxu0 0
    %1694 = vmatprep.subr.bf16.mxu0 0
    %1695 = vmatpush2.bf16.msra.mxu0 0
    %1696 = vmatprep.subr.bf16.mxu0 0
    %1697 = vmatpush2.bf16.msra.mxu0 0
    %1698 = vmatprep.subr.bf16.mxu0 0
    %1699 = vmatpush2.bf16.msra.mxu0 0
    %1700 = vmatprep.subr.bf16.mxu0 0
    %1701 = vmatpush2.bf16.msra.mxu0 0
    %1702 = vmatprep.subr.bf16.mxu0 0
    %1703 = vmatpush2.bf16.msra.mxu0 0
    %1704 = vmatprep.mubr.bf16.mxu0 0
    %1705 = vmatmul.mubr.bf16.gmra.mxu0 %v1670
    %v1706 = vpop.f32.mrf.mxu0
    %v1707 = vadd.f32 %v1666, %v1706
    %v1708 = vpop.f32.mrf.mxu0
    %v1709 = vpop.f32.mrf.mxu0
    %v1710 = vpop.f32.mrf.mxu0
    %1711 = vdwg.mxu0
    %v1712 = vmul.f32 %v1707, 0.5
    %v1713 = vtanh.pop %v1712
    %v1714 = vadd.f32 %v1713, 1.0
    %v1715 = vmul.f32 %v1714, 0.5
    %1716 = vst [vmem:[#allocation2] sm:$0x7] %v1715
    %1717 = vst [vmem:[#allocation2 + $0x3] sm:$0x1] %v1659
    // Predicated region
    $region34: #{tpu_custom_call.1} parent=1 // pred_check
      _
    $region35: #{tpu_custom_call.1} parent=1 // pred_check_branch
      %1719 = sbr.rel (0) target = $region37
    $region36: #{tpu_custom_call.1} parent=1 // pred_region
      %s1721 = ssub.s32 64, 64
      %1722 = vsyncadd [#allocation3], %s1721
      %s1724 = sshll.u32 [#allocation2], 4
      %s1725 = int_to_ptr.vmem [resolvable:$true] %s1724
      %1727 = dma.vmem_to_hbm [thread:$0]  %s1725, 64, %s8, [#allocation3]
    $region37: #{tpu_custom_call.1} parent=1 // pred_fallthru
      _
    // Predicated region
    $region38: #{tpu_custom_call.1} parent=1 // pred_check
      _
    $region39: #{tpu_custom_call.1} parent=1 // pred_check_branch
      %1729 = sbr.rel (0) target = $region41
    $region40: #{tpu_custom_call.1} parent=1 // pred_region
      %1730 = dma.done [#allocation3], 64
    $region41: #{tpu_custom_call.1} parent=1 // pred_fallthru
      _
    %1731 = vsyncpa [#allocation3], 1

</llo_original>
